<compile_context>
chip_gen: v6e
topology: v6e:2x2x1
jax: 0.10.0
libtpu: 0.0.40
codegen_flags: <defaults>
</compile_context>

<pallas_src>
import functools

import jax
import jax.numpy as jnp
from jax import lax
from jax.experimental import pallas as pl
from jax.experimental.pallas import tpu as pltpu

# dot_general dimension numbers for A @ B^T (contract the last dim of both).
_NT = (((1,), (1,)), ((), ()))


# ----------------------------------------------------------------------------
# Pallas kernel: whole DGI forward (both graphs) in one grid-less call.
# ----------------------------------------------------------------------------
def dgi_kernel(x_ref, xc_ref, adj_ref, edge_ref,
               w1_ref, asrc1_ref, adst1_ref, v1_ref, b1_ref,
               w2_ref, asrc2_ref, adst2_ref, v2_ref, b2_ref,
               wd_ref, bd_ref, out_ref, *, heads, n_nodes):
    f32 = jnp.float32
    n = n_nodes
    n_edge = edge_ref.shape[0]

    # ---- loop-invariant work, hoisted once --------------------------------
    x_all = jnp.concatenate([x_ref[...], xc_ref[...]], axis=0)       # (2N, Cin)
    mask = adj_ref[...] > 0                                          # (2N, N)
    neg = jnp.full(mask.shape, -1e30, dtype=f32)                     # mask fill
    planes = [edge_ref[d] for d in range(n_edge)]                    # Ed x (2N, N)

    def gat_layer(h_feat, asrc_ref, adst_ref, v_ref, b_ref, n_heads, feat, elu):
        """One GATConv on the batched (2N, H*feat) features of both graphs."""
        chunks = []
        for hh in range(n_heads):                                    # tiny H, unrolled
            h_h = h_feat[:, hh * feat:(hh + 1) * feat]               # (2N, F)
            h_a = h_h[0:n]                                           # clean graph
            h_b = h_h[n:2 * n]                                       # corrupted graph

            # per-head edge logit plane (edge attrs shared by both graphs)
            ae = v_ref[hh * n_edge] * planes[0]
            for d in range(1, n_edge):
                ae = ae + v_ref[hh * n_edge + d] * planes[d]

            # src coefficients produced lane-oriented (MXU, no XLU transpose)
            a_vec = asrc_ref[hh]                                     # (1, F)
            src_a = lax.dot_general(a_vec, h_a, _NT, preferred_element_type=f32)
            src_b = lax.dot_general(a_vec, h_b, _NT, preferred_element_type=f32)
            src = jnp.concatenate(
                [jnp.broadcast_to(src_a, (n, n)),
                 jnp.broadcast_to(src_b, (n, n))], axis=0)           # (2N, N)
            dst = lax.dot_general(h_h, adst_ref[hh], _NT,
                                  preferred_element_type=f32)        # (2N, 1)

            # attention logits + masked softmax for BOTH graphs at once
            e = dst + src + ae
            e = jnp.where(e > 0, e, 0.2 * e)                         # LeakyReLU(0.2)
            e = jnp.where(mask, e, neg)
            m = jnp.max(e, axis=1, keepdims=True)
            p = jnp.where(mask, jnp.exp(e - m), 0.0)
            denom = jnp.maximum(jnp.sum(p, axis=1, keepdims=True), 1e-20)
            r = pl.reciprocal(denom, approx=True)                    # EUP slot
            r = r * (2.0 - denom * r)                                # Newton -> ~f32
            attn = p * r                                             # (2N, N)

            # per-graph aggregation (block-diagonal matmul as two small dots)
            o = jnp.concatenate(
                [jnp.dot(attn[0:n], h_a, preferred_element_type=f32),
                 jnp.dot(attn[n:2 * n], h_b, preferred_element_type=f32)],
                axis=0) + b_ref[hh]                                  # (2N, F)
            if elu:
                o = jnp.where(o > 0, o, jnp.exp(o) - 1.0)            # ELU
            chunks.append(o)
        return chunks                                                # per-head chunks

    # ---- GAT layer 1: heads folded, both graphs in one matmul --------------
    f1 = w1_ref.shape[1] // heads
    h1 = jnp.dot(x_all, w1_ref[...], preferred_element_type=f32)     # (2N, H*F1)
    chunks = gat_layer(h1, asrc1_ref, adst1_ref, v1_ref, b1_ref, heads, f1, True)

    # ---- GAT layer 2: head chunks consumed as row-blocks of W2 -------------
    f2 = w2_ref.shape[1]
    w2 = w2_ref[...]
    h2 = jnp.dot(chunks[0], w2[0:f1, :], preferred_element_type=f32)
    for hh in range(1, heads):
        h2 = h2 + jnp.dot(chunks[hh], w2[hh * f1:(hh + 1) * f1, :],
                          preferred_element_type=f32)                # (2N, F2)
    h_out = gat_layer(h2, asrc2_ref, adst2_ref, v2_ref, b2_ref, 1, f2, False)[0]

    # ---- AvgReadout + sigmoid + bilinear discriminator, fused --------------
    c = jax.nn.sigmoid(jnp.mean(h_out[0:n], axis=0, keepdims=True))  # (1, F2)
    wc = lax.dot_general(c, wd_ref[...], _NT,
                         preferred_element_type=f32)                 # (1, F2) = (W @ c)^T
    scores = lax.dot_general(wc, h_out, _NT,
                             preferred_element_type=f32)             # (1, 2N)
    out_ref[...] = scores + bd_ref[0]                                # lane-dense write


# ----------------------------------------------------------------------------
# One-time preprocessing (kept OUT of the per-call jitted forward)
# ----------------------------------------------------------------------------
def fold_params(params):
    w1, we1, asrc1, adst1, aedge1, b1 = params["conv1"]
    h, cin, f1 = w1.shape
    w2, we2, asrc2, adst2, aedge2, b2 = params["conv2"]
    return dict(
        w1=jnp.transpose(w1, (1, 0, 2)).reshape(cin, h * f1),        # heads folded
        asrc1=asrc1, adst1=adst1, b1=b1,                             # (H, 1, F1)
        v1=jnp.einsum("hdf,hf->hd", we1, aedge1[:, 0, :]).reshape(-1),  # (H*Ed,) 1-D
        w2=w2[0],                                                    # (H*F1, F2)
        asrc2=asrc2, adst2=adst2, b2=b2,                             # (1, 1, F2)
        v2=jnp.einsum("hdf,hf->hd", we2, aedge2[:, 0, :]).reshape(-1),  # (Ed,) 1-D
        disc_w=params["disc_w"],                                     # (F2, F2)
        disc_b=params["disc_b"].reshape(-1),                         # (1,)
    )


def fold_graph(adj, edge_attr):
    adj2 = jnp.concatenate([adj, adj], axis=0)                       # (2N, N)
    planes = jnp.transpose(edge_attr, (2, 0, 1))                     # (Ed, N, N)
    edge2 = jnp.concatenate([planes, planes], axis=1)                # (Ed, 2N, N)
    return adj2, edge2


# ----------------------------------------------------------------------------
# Forward wrapper: exactly one pallas_call, no grid.
# ----------------------------------------------------------------------------
def dgi_forward(x, x_corrupt, adj2, edge_planes, folded):
    n = x.shape[0]
    heads = folded["asrc1"].shape[0]
    vmem = pl.BlockSpec(memory_space=pltpu.MemorySpace.VMEM)
    smem = pl.BlockSpec(memory_space=pltpu.MemorySpace.SMEM)

    logits = pl.pallas_call(
        functools.partial(dgi_kernel, heads=heads, n_nodes=n),
        out_shape=jax.ShapeDtypeStruct((1, 2 * n), jnp.float32),
        in_specs=[vmem, vmem, vmem, vmem,            # x, x_corrupt, adj2, edge planes
                  vmem, vmem, vmem, smem, vmem,      # W1, att_src1, att_dst1, v1, b1
                  vmem, vmem, vmem, smem, vmem,      # W2, att_src2, att_dst2, v2, b2
                  vmem, smem],                       # disc_w, disc_b
        out_specs=vmem,
    )(x, x_corrupt, adj2, edge_planes,
      folded["w1"], folded["asrc1"], folded["adst1"], folded["v1"], folded["b1"],
      folded["w2"], folded["asrc2"], folded["adst2"], folded["v2"], folded["b2"],
      folded["disc_w"], folded["disc_b"])
    return logits.reshape(-1)                        # (2N,): [sc_clean ; sc_corrupt]


# ----------------------------------------------------------------------------
# Pure-JAX reference (correctness check)
# ----------------------------------------------------------------------------
def _gat_layer_ref(x, adj, edge_attr, W, We, a_src, a_dst, a_edge, bias, apply_elu):
    outs = []
    for hh in range(W.shape[0]):
        h = x @ W[hh]
        asrc = jnp.sum(h * a_src[hh, 0], axis=-1)
        adst = jnp.sum(h * a_dst[hh, 0], axis=-1)
        v = jnp.sum(We[hh] * a_edge[hh, 0], axis=-1)
        ae = jnp.sum(edge_attr * v[None, None, :], axis=-1)
        e = adst[:, None] + asrc[None, :] + ae
        e = jnp.where(e > 0, e, 0.2 * e)
        e = jnp.where(adj > 0, e, -1e30)
        p = jnp.exp(e - jnp.max(e, axis=1, keepdims=True))
        p = jnp.where(adj > 0, p, 0.0)
        attn = p / jnp.sum(p, axis=1, keepdims=True)
        o = attn @ h + bias[hh, 0]
        if apply_elu:
            o = jnp.where(o > 0, o, jnp.exp(o) - 1.0)
        outs.append(o)
    return jnp.concatenate(outs, axis=-1)


def _dgi_ref(x, x_corrupt, adj, edge_attr, params):
    def net(z):
        h = _gat_layer_ref(z, adj, edge_attr, *params["conv1"], apply_elu=True)
        return _gat_layer_ref(h, adj, edge_attr, *params["conv2"], apply_elu=False)
    h1, h2 = net(x), net(x_corrupt)
    c = jax.nn.sigmoid(jnp.mean(h1, axis=0))
    wb, b = params["disc_w"], params["disc_b"][0, 0]
    sc1 = h1 @ (wb @ c) + b
    sc2 = h2 @ (wb @ c) + b
    return jnp.concatenate([sc1, sc2], axis=0)


# ----------------------------------------------------------------------------
# Main
# ----------------------------------------------------------------------------
if __name__ == "__main__":
    N, Cin, Chid, Cout, heads, Ed = 16, 8, 8, 16, 2, 4

    key = jax.random.PRNGKey(0)
    ks = jax.random.split(key, 20)

    def nrm(k, shape, scale=0.2):
        return jax.random.normal(k, shape, dtype=jnp.float32) * scale

    params = {
        "conv1": (
            nrm(ks[0], (heads, Cin, Chid)),      # W
            nrm(ks[1], (heads, Ed, Chid)),       # W_edge
            nrm(ks[2], (heads, 1, Chid)),        # att_src
            nrm(ks[3], (heads, 1, Chid)),        # att_dst
            nrm(ks[4], (heads, 1, Chid)),        # att_edge
            nrm(ks[5], (heads, 1, Chid)),        # bias
        ),
        "conv2": (
            nrm(ks[6], (1, heads * Chid, Cout)),
            nrm(ks[7], (1, Ed, Cout)),
            nrm(ks[8], (1, 1, Cout)),
            nrm(ks[9], (1, 1, Cout)),
            nrm(ks[10], (1, 1, Cout)),
            nrm(ks[11], (1, 1, Cout)),
        ),
        "disc_w": nrm(ks[12], (Cout, Cout)),     # nn.Bilinear weight[0]
        "disc_b": nrm(ks[13], (1, 1)),           # nn.Bilinear bias
    }

    # Synthetic graph (dense): random edges + self loops.
    adj = (jax.random.uniform(ks[14], (N, N)) < 0.3).astype(jnp.float32)
    adj = jnp.maximum(adj, jnp.eye(N, dtype=jnp.float32))
    edge_attr = nrm(ks[15], (N, N, Ed), scale=1.0)

    x = nrm(ks[16], (N, Cin), scale=1.0)
    perm = jax.random.permutation(ks[17], N)
    x_corrupt = x[perm]                          # DGI row-shuffle corruption

    # One-time preprocessing, outside the jitted forward (per perf review).
    folded = fold_params(params)
    adj2, edge_planes = fold_graph(adj, edge_attr)

    fwd = jax.jit(dgi_forward)
    out = jax.block_until_ready(fwd(x, x_corrupt, adj2, edge_planes, folded))

    ref = _dgi_ref(x, x_corrupt, adj, edge_attr, params)
    assert out.shape == (2 * N,)
    # approx reciprocal + 1 Newton step restores ~f32 accuracy.
    assert jnp.allclose(out, ref, atol=1e-4, rtol=1e-4), (out, ref)

    print("KERNEL_OK")
</pallas_src>

<mosaic_0001>
module attributes {stable_mosaic.version = 11 : i64} {
  func.func @dgi_kernel(%arg0: memref<16x8xf32, #tpu.memory_space<vmem>>, %arg1: memref<16x8xf32, #tpu.memory_space<vmem>>, %arg2: memref<32x16xf32, #tpu.memory_space<vmem>>, %arg3: memref<4x32x16xf32, #tpu.memory_space<vmem>>, %arg4: memref<8x16xf32, #tpu.memory_space<vmem>>, %arg5: memref<2x1x8xf32, #tpu.memory_space<vmem>>, %arg6: memref<2x1x8xf32, #tpu.memory_space<vmem>>, %arg7: memref<8xf32, #tpu.memory_space<smem>>, %arg8: memref<2x1x8xf32, #tpu.memory_space<vmem>>, %arg9: memref<16x16xf32, #tpu.memory_space<vmem>>, %arg10: memref<1x1x16xf32, #tpu.memory_space<vmem>>, %arg11: memref<1x1x16xf32, #tpu.memory_space<vmem>>, %arg12: memref<4xf32, #tpu.memory_space<smem>>, %arg13: memref<1x1x16xf32, #tpu.memory_space<vmem>>, %arg14: memref<16x16xf32, #tpu.memory_space<vmem>>, %arg15: memref<1xf32, #tpu.memory_space<smem>>, %arg16: memref<1x32xf32, #tpu.memory_space<vmem>>) attributes {dimension_semantics = [], scalar_prefetch = 0 : i64, scratch_operands = 0 : i64, tpu.core_type = #tpu.core_type<tc>} {
    %c0 = arith.constant 0 : index
    %c0_0 = arith.constant 0 : index
    %0 = vector.load %arg0[%c0, %c0_0] : memref<16x8xf32, #tpu.memory_space<vmem>>, vector<16x8xf32>
    %c0_1 = arith.constant 0 : index
    %c0_2 = arith.constant 0 : index
    %1 = vector.load %arg1[%c0_1, %c0_2] : memref<16x8xf32, #tpu.memory_space<vmem>>, vector<16x8xf32>
    %2 = tpu.concatenate %0, %1 in 0 : vector<16x8xf32>, vector<16x8xf32> -> vector<32x8xf32>
    %c0_3 = arith.constant 0 : index
    %c0_4 = arith.constant 0 : index
    %3 = vector.load %arg2[%c0_3, %c0_4] : memref<32x16xf32, #tpu.memory_space<vmem>>, vector<32x16xf32>
    %cst = arith.constant 0.000000e+00 : f32
    %4 = vector.broadcast %cst : f32 to vector<32x16xf32>
    %5 = arith.cmpf ogt, %3, %4 : vector<32x16xf32>
    %cst_5 = arith.constant -1.000000e+30 : f32
    %6 = vector.broadcast %cst_5 : f32 to vector<32x16xf32>
    %c0_6 = arith.constant 0 : index
    %c0_7 = arith.constant 0 : index
    %c0_8 = arith.constant 0 : index
    %7 = vector.load %arg3[%c0_6, %c0_7, %c0_8] : memref<4x32x16xf32, #tpu.memory_space<vmem>>, vector<1x32x16xf32>
    %8 = vector.shape_cast %7 : vector<1x32x16xf32> to vector<32x16xf32>
    %c1 = arith.constant 1 : index
    %c0_9 = arith.constant 0 : index
    %c0_10 = arith.constant 0 : index
    %9 = vector.load %arg3[%c1, %c0_9, %c0_10] : memref<4x32x16xf32, #tpu.memory_space<vmem>>, vector<1x32x16xf32>
    %10 = vector.shape_cast %9 : vector<1x32x16xf32> to vector<32x16xf32>
    %c2 = arith.constant 2 : index
    %c0_11 = arith.constant 0 : index
    %c0_12 = arith.constant 0 : index
    %11 = vector.load %arg3[%c2, %c0_11, %c0_12] : memref<4x32x16xf32, #tpu.memory_space<vmem>>, vector<1x32x16xf32>
    %12 = vector.shape_cast %11 : vector<1x32x16xf32> to vector<32x16xf32>
    %c3 = arith.constant 3 : index
    %c0_13 = arith.constant 0 : index
    %c0_14 = arith.constant 0 : index
    %13 = vector.load %arg3[%c3, %c0_13, %c0_14] : memref<4x32x16xf32, #tpu.memory_space<vmem>>, vector<1x32x16xf32>
    %14 = vector.shape_cast %13 : vector<1x32x16xf32> to vector<32x16xf32>
    %c0_15 = arith.constant 0 : index
    %c0_16 = arith.constant 0 : index
    %15 = vector.load %arg4[%c0_15, %c0_16] : memref<8x16xf32, #tpu.memory_space<vmem>>, vector<8x16xf32>
    %cst_17 = arith.constant dense<0.000000e+00> : vector<32x16xf32>
    %16 = tpu.matmul %2, %15, %cst_17 {dimension_numbers = #tpu.dot_dimension_numbers<[1], [0], [0], [1], [0, 0, 1, 1], [], []>} : vector<32x8xf32>, vector<8x16xf32>, vector<32x16xf32> -> vector<32x16xf32>
    %17 = vector.extract_strided_slice %16 {offsets = [0, 0], sizes = [32, 8], strides = [1, 1]} : vector<32x16xf32> to vector<32x8xf32>
    %18 = vector.extract_strided_slice %17 {offsets = [0, 0], sizes = [16, 8], strides = [1, 1]} : vector<32x8xf32> to vector<16x8xf32>
    %19 = vector.extract_strided_slice %17 {offsets = [16, 0], sizes = [16, 8], strides = [1, 1]} : vector<32x8xf32> to vector<16x8xf32>
    %c0_18 = arith.constant 0 : index
    %20 = memref.load %arg7[%c0_18] : memref<8xf32, #tpu.memory_space<smem>>
    %21 = vector.broadcast %20 : f32 to vector<32x16xf32>
    %22 = arith.mulf %21, %8 : vector<32x16xf32>
    %c1_19 = arith.constant 1 : index
    %23 = memref.load %arg7[%c1_19] : memref<8xf32, #tpu.memory_space<smem>>
    %24 = vector.broadcast %23 : f32 to vector<32x16xf32>
    %25 = arith.mulf %24, %10 : vector<32x16xf32>
    %26 = arith.addf %22, %25 : vector<32x16xf32>
    %c2_20 = arith.constant 2 : index
    %27 = memref.load %arg7[%c2_20] : memref<8xf32, #tpu.memory_space<smem>>
    %28 = vector.broadcast %27 : f32 to vector<32x16xf32>
    %29 = arith.mulf %28, %12 : vector<32x16xf32>
    %30 = arith.addf %26, %29 : vector<32x16xf32>
    %c3_21 = arith.constant 3 : index
    %31 = memref.load %arg7[%c3_21] : memref<8xf32, #tpu.memory_space<smem>>
    %32 = vector.broadcast %31 : f32 to vector<32x16xf32>
    %33 = arith.mulf %32, %14 : vector<32x16xf32>
    %34 = arith.addf %30, %33 : vector<32x16xf32>
    %c0_22 = arith.constant 0 : index
    %c0_23 = arith.constant 0 : index
    %c0_24 = arith.constant 0 : index
    %35 = vector.load %arg5[%c0_22, %c0_23, %c0_24] : memref<2x1x8xf32, #tpu.memory_space<vmem>>, vector<1x1x8xf32>
    %36 = vector.shape_cast %35 : vector<1x1x8xf32> to vector<1x8xf32>
    %cst_25 = arith.constant dense<0.000000e+00> : vector<1x16xf32>
    %37 = tpu.matmul %36, %18, %cst_25 {dimension_numbers = #tpu.dot_dimension_numbers<[1], [1], [0], [0], [0, 0, 1, 0], [], []>} : vector<1x8xf32>, vector<16x8xf32>, vector<1x16xf32> -> vector<1x16xf32>
    %cst_26 = arith.constant dense<0.000000e+00> : vector<1x16xf32>
    %38 = tpu.matmul %36, %19, %cst_26 {dimension_numbers = #tpu.dot_dimension_numbers<[1], [1], [0], [0], [0, 0, 1, 0], [], []>} : vector<1x8xf32>, vector<16x8xf32>, vector<1x16xf32> -> vector<1x16xf32>
    %39 = vector.shape_cast %37 : vector<1x16xf32> to vector<1x16xf32>
    %40 = vector.broadcast %39 : vector<1x16xf32> to vector<16x16xf32>
    %41 = vector.shape_cast %38 : vector<1x16xf32> to vector<1x16xf32>
    %42 = vector.broadcast %41 : vector<1x16xf32> to vector<16x16xf32>
    %43 = tpu.concatenate %40, %42 in 0 : vector<16x16xf32>, vector<16x16xf32> -> vector<32x16xf32>
    %c0_27 = arith.constant 0 : index
    %c0_28 = arith.constant 0 : index
    %c0_29 = arith.constant 0 : index
    %44 = vector.load %arg6[%c0_27, %c0_28, %c0_29] : memref<2x1x8xf32, #tpu.memory_space<vmem>>, vector<1x1x8xf32>
    %45 = vector.shape_cast %44 : vector<1x1x8xf32> to vector<1x8xf32>
    %cst_30 = arith.constant dense<0.000000e+00> : vector<32x1xf32>
    %46 = tpu.matmul %17, %45, %cst_30 {dimension_numbers = #tpu.dot_dimension_numbers<[1], [1], [0], [0], [0, 0, 1, 0], [], []>} : vector<32x8xf32>, vector<1x8xf32>, vector<32x1xf32> -> vector<32x1xf32>
    %47 = vector.broadcast %46 : vector<32x1xf32> to vector<32x16xf32>
    %48 = arith.addf %47, %43 : vector<32x16xf32>
    %49 = arith.addf %48, %34 : vector<32x16xf32>
    %cst_31 = arith.constant 0.000000e+00 : f32
    %50 = vector.broadcast %cst_31 : f32 to vector<32x16xf32>
    %51 = arith.cmpf ogt, %49, %50 : vector<32x16xf32>
    %cst_32 = arith.constant 2.000000e-01 : f32
    %52 = vector.broadcast %cst_32 : f32 to vector<32x16xf32>
    %53 = arith.mulf %52, %49 : vector<32x16xf32>
    %54 = arith.select %51, %49, %53 : vector<32x16xi1>, vector<32x16xf32>
    %55 = arith.select %5, %54, %6 : vector<32x16xi1>, vector<32x16xf32>
    %cst_33 = arith.constant dense<0xFF800000> : vector<32xf32>
    %56 = vector.multi_reduction <maximumf>, %55, %cst_33 [1] : vector<32x16xf32> to vector<32xf32>
    %57 = vector.shape_cast %56 : vector<32xf32> to vector<32x1xf32>
    %58 = vector.broadcast %57 : vector<32x1xf32> to vector<32x16xf32>
    %59 = arith.subf %55, %58 : vector<32x16xf32>
    %60 = math.exp %59 : vector<32x16xf32>
    %cst_34 = arith.constant 0.000000e+00 : f32
    %61 = vector.broadcast %cst_34 : f32 to vector<32x16xf32>
    %62 = arith.select %5, %60, %61 : vector<32x16xi1>, vector<32x16xf32>
    %cst_35 = arith.constant dense<0.000000e+00> : vector<32xf32>
    %63 = vector.multi_reduction <add>, %62, %cst_35 [1] : vector<32x16xf32> to vector<32xf32>
    %64 = vector.shape_cast %63 : vector<32xf32> to vector<32x1xf32>
    %cst_36 = arith.constant 9.99999968E-21 : f32
    %65 = vector.broadcast %cst_36 : f32 to vector<32x1xf32>
    %66 = arith.maximumf %64, %65 : vector<32x1xf32>
    %67 = tpu.reciprocal %66 {approx = true} : vector<32x1xf32> -> vector<32x1xf32>
    %68 = arith.mulf %66, %67 : vector<32x1xf32>
    %cst_37 = arith.constant 2.000000e+00 : f32
    %69 = vector.broadcast %cst_37 : f32 to vector<32x1xf32>
    %70 = arith.subf %69, %68 : vector<32x1xf32>
    %71 = arith.mulf %67, %70 : vector<32x1xf32>
    %72 = vector.broadcast %71 : vector<32x1xf32> to vector<32x16xf32>
    %73 = arith.mulf %62, %72 : vector<32x16xf32>
    %74 = vector.extract_strided_slice %73 {offsets = [0, 0], sizes = [16, 16], strides = [1, 1]} : vector<32x16xf32> to vector<16x16xf32>
    %cst_38 = arith.constant dense<0.000000e+00> : vector<16x8xf32>
    %75 = tpu.matmul %74, %18, %cst_38 {dimension_numbers = #tpu.dot_dimension_numbers<[1], [0], [0], [1], [0, 0, 1, 1], [], []>} : vector<16x16xf32>, vector<16x8xf32>, vector<16x8xf32> -> vector<16x8xf32>
    %76 = vector.extract_strided_slice %73 {offsets = [16, 0], sizes = [16, 16], strides = [1, 1]} : vector<32x16xf32> to vector<16x16xf32>
    %cst_39 = arith.constant dense<0.000000e+00> : vector<16x8xf32>
    %77 = tpu.matmul %76, %19, %cst_39 {dimension_numbers = #tpu.dot_dimension_numbers<[1], [0], [0], [1], [0, 0, 1, 1], [], []>} : vector<16x16xf32>, vector<16x8xf32>, vector<16x8xf32> -> vector<16x8xf32>
    %78 = tpu.concatenate %75, %77 in 0 : vector<16x8xf32>, vector<16x8xf32> -> vector<32x8xf32>
    %c0_40 = arith.constant 0 : index
    %c0_41 = arith.constant 0 : index
    %c0_42 = arith.constant 0 : index
    %79 = vector.load %arg8[%c0_40, %c0_41, %c0_42] : memref<2x1x8xf32, #tpu.memory_space<vmem>>, vector<1x1x8xf32>
    %80 = vector.shape_cast %79 : vector<1x1x8xf32> to vector<1x8xf32>
    %81 = vector.broadcast %80 : vector<1x8xf32> to vector<32x8xf32>
    %82 = arith.addf %78, %81 : vector<32x8xf32>
    %cst_43 = arith.constant 0.000000e+00 : f32
    %83 = vector.broadcast %cst_43 : f32 to vector<32x8xf32>
    %84 = arith.cmpf ogt, %82, %83 : vector<32x8xf32>
    %85 = math.exp %82 : vector<32x8xf32>
    %cst_44 = arith.constant 1.000000e+00 : f32
    %86 = vector.broadcast %cst_44 : f32 to vector<32x8xf32>
    %87 = arith.subf %85, %86 : vector<32x8xf32>
    %88 = arith.select %84, %82, %87 : vector<32x8xi1>, vector<32x8xf32>
    %89 = vector.extract_strided_slice %16 {offsets = [0, 8], sizes = [32, 8], strides = [1, 1]} : vector<32x16xf32> to vector<32x8xf32>
    %90 = vector.extract_strided_slice %89 {offsets = [0, 0], sizes = [16, 8], strides = [1, 1]} : vector<32x8xf32> to vector<16x8xf32>
    %91 = vector.extract_strided_slice %89 {offsets = [16, 0], sizes = [16, 8], strides = [1, 1]} : vector<32x8xf32> to vector<16x8xf32>
    %c4 = arith.constant 4 : index
    %92 = memref.load %arg7[%c4] : memref<8xf32, #tpu.memory_space<smem>>
    %93 = vector.broadcast %92 : f32 to vector<32x16xf32>
    %94 = arith.mulf %93, %8 : vector<32x16xf32>
    %c5 = arith.constant 5 : index
    %95 = memref.load %arg7[%c5] : memref<8xf32, #tpu.memory_space<smem>>
    %96 = vector.broadcast %95 : f32 to vector<32x16xf32>
    %97 = arith.mulf %96, %10 : vector<32x16xf32>
    %98 = arith.addf %94, %97 : vector<32x16xf32>
    %c6 = arith.constant 6 : index
    %99 = memref.load %arg7[%c6] : memref<8xf32, #tpu.memory_space<smem>>
    %100 = vector.broadcast %99 : f32 to vector<32x16xf32>
    %101 = arith.mulf %100, %12 : vector<32x16xf32>
    %102 = arith.addf %98, %101 : vector<32x16xf32>
    %c7 = arith.constant 7 : index
    %103 = memref.load %arg7[%c7] : memref<8xf32, #tpu.memory_space<smem>>
    %104 = vector.broadcast %103 : f32 to vector<32x16xf32>
    %105 = arith.mulf %104, %14 : vector<32x16xf32>
    %106 = arith.addf %102, %105 : vector<32x16xf32>
    %c1_45 = arith.constant 1 : index
    %c0_46 = arith.constant 0 : index
    %c0_47 = arith.constant 0 : index
    %107 = vector.load %arg5[%c1_45, %c0_46, %c0_47] : memref<2x1x8xf32, #tpu.memory_space<vmem>>, vector<1x1x8xf32>
    %108 = vector.shape_cast %107 : vector<1x1x8xf32> to vector<1x8xf32>
    %cst_48 = arith.constant dense<0.000000e+00> : vector<1x16xf32>
    %109 = tpu.matmul %108, %90, %cst_48 {dimension_numbers = #tpu.dot_dimension_numbers<[1], [1], [0], [0], [0, 0, 1, 0], [], []>} : vector<1x8xf32>, vector<16x8xf32>, vector<1x16xf32> -> vector<1x16xf32>
    %cst_49 = arith.constant dense<0.000000e+00> : vector<1x16xf32>
    %110 = tpu.matmul %108, %91, %cst_49 {dimension_numbers = #tpu.dot_dimension_numbers<[1], [1], [0], [0], [0, 0, 1, 0], [], []>} : vector<1x8xf32>, vector<16x8xf32>, vector<1x16xf32> -> vector<1x16xf32>
    %111 = vector.shape_cast %109 : vector<1x16xf32> to vector<1x16xf32>
    %112 = vector.broadcast %111 : vector<1x16xf32> to vector<16x16xf32>
    %113 = vector.shape_cast %110 : vector<1x16xf32> to vector<1x16xf32>
    %114 = vector.broadcast %113 : vector<1x16xf32> to vector<16x16xf32>
    %115 = tpu.concatenate %112, %114 in 0 : vector<16x16xf32>, vector<16x16xf32> -> vector<32x16xf32>
    %c1_50 = arith.constant 1 : index
    %c0_51 = arith.constant 0 : index
    %c0_52 = arith.constant 0 : index
    %116 = vector.load %arg6[%c1_50, %c0_51, %c0_52] : memref<2x1x8xf32, #tpu.memory_space<vmem>>, vector<1x1x8xf32>
    %117 = vector.shape_cast %116 : vector<1x1x8xf32> to vector<1x8xf32>
    %cst_53 = arith.constant dense<0.000000e+00> : vector<32x1xf32>
    %118 = tpu.matmul %89, %117, %cst_53 {dimension_numbers = #tpu.dot_dimension_numbers<[1], [1], [0], [0], [0, 0, 1, 0], [], []>} : vector<32x8xf32>, vector<1x8xf32>, vector<32x1xf32> -> vector<32x1xf32>
    %119 = vector.broadcast %118 : vector<32x1xf32> to vector<32x16xf32>
    %120 = arith.addf %119, %115 : vector<32x16xf32>
    %121 = arith.addf %120, %106 : vector<32x16xf32>
    %cst_54 = arith.constant 0.000000e+00 : f32
    %122 = vector.broadcast %cst_54 : f32 to vector<32x16xf32>
    %123 = arith.cmpf ogt, %121, %122 : vector<32x16xf32>
    %cst_55 = arith.constant 2.000000e-01 : f32
    %124 = vector.broadcast %cst_55 : f32 to vector<32x16xf32>
    %125 = arith.mulf %124, %121 : vector<32x16xf32>
    %126 = arith.select %123, %121, %125 : vector<32x16xi1>, vector<32x16xf32>
    %127 = arith.select %5, %126, %6 : vector<32x16xi1>, vector<32x16xf32>
    %cst_56 = arith.constant dense<0xFF800000> : vector<32xf32>
    %128 = vector.multi_reduction <maximumf>, %127, %cst_56 [1] : vector<32x16xf32> to vector<32xf32>
    %129 = vector.shape_cast %128 : vector<32xf32> to vector<32x1xf32>
    %130 = vector.broadcast %129 : vector<32x1xf32> to vector<32x16xf32>
    %131 = arith.subf %127, %130 : vector<32x16xf32>
    %132 = math.exp %131 : vector<32x16xf32>
    %cst_57 = arith.constant 0.000000e+00 : f32
    %133 = vector.broadcast %cst_57 : f32 to vector<32x16xf32>
    %134 = arith.select %5, %132, %133 : vector<32x16xi1>, vector<32x16xf32>
    %cst_58 = arith.constant dense<0.000000e+00> : vector<32xf32>
    %135 = vector.multi_reduction <add>, %134, %cst_58 [1] : vector<32x16xf32> to vector<32xf32>
    %136 = vector.shape_cast %135 : vector<32xf32> to vector<32x1xf32>
    %cst_59 = arith.constant 9.99999968E-21 : f32
    %137 = vector.broadcast %cst_59 : f32 to vector<32x1xf32>
    %138 = arith.maximumf %136, %137 : vector<32x1xf32>
    %139 = tpu.reciprocal %138 {approx = true} : vector<32x1xf32> -> vector<32x1xf32>
    %140 = arith.mulf %138, %139 : vector<32x1xf32>
    %cst_60 = arith.constant 2.000000e+00 : f32
    %141 = vector.broadcast %cst_60 : f32 to vector<32x1xf32>
    %142 = arith.subf %141, %140 : vector<32x1xf32>
    %143 = arith.mulf %139, %142 : vector<32x1xf32>
    %144 = vector.broadcast %143 : vector<32x1xf32> to vector<32x16xf32>
    %145 = arith.mulf %134, %144 : vector<32x16xf32>
    %146 = vector.extract_strided_slice %145 {offsets = [0, 0], sizes = [16, 16], strides = [1, 1]} : vector<32x16xf32> to vector<16x16xf32>
    %cst_61 = arith.constant dense<0.000000e+00> : vector<16x8xf32>
    %147 = tpu.matmul %146, %90, %cst_61 {dimension_numbers = #tpu.dot_dimension_numbers<[1], [0], [0], [1], [0, 0, 1, 1], [], []>} : vector<16x16xf32>, vector<16x8xf32>, vector<16x8xf32> -> vector<16x8xf32>
    %148 = vector.extract_strided_slice %145 {offsets = [16, 0], sizes = [16, 16], strides = [1, 1]} : vector<32x16xf32> to vector<16x16xf32>
    %cst_62 = arith.constant dense<0.000000e+00> : vector<16x8xf32>
    %149 = tpu.matmul %148, %91, %cst_62 {dimension_numbers = #tpu.dot_dimension_numbers<[1], [0], [0], [1], [0, 0, 1, 1], [], []>} : vector<16x16xf32>, vector<16x8xf32>, vector<16x8xf32> -> vector<16x8xf32>
    %150 = tpu.concatenate %147, %149 in 0 : vector<16x8xf32>, vector<16x8xf32> -> vector<32x8xf32>
    %c1_63 = arith.constant 1 : index
    %c0_64 = arith.constant 0 : index
    %c0_65 = arith.constant 0 : index
    %151 = vector.load %arg8[%c1_63, %c0_64, %c0_65] : memref<2x1x8xf32, #tpu.memory_space<vmem>>, vector<1x1x8xf32>
    %152 = vector.shape_cast %151 : vector<1x1x8xf32> to vector<1x8xf32>
    %153 = vector.broadcast %152 : vector<1x8xf32> to vector<32x8xf32>
    %154 = arith.addf %150, %153 : vector<32x8xf32>
    %cst_66 = arith.constant 0.000000e+00 : f32
    %155 = vector.broadcast %cst_66 : f32 to vector<32x8xf32>
    %156 = arith.cmpf ogt, %154, %155 : vector<32x8xf32>
    %157 = math.exp %154 : vector<32x8xf32>
    %cst_67 = arith.constant 1.000000e+00 : f32
    %158 = vector.broadcast %cst_67 : f32 to vector<32x8xf32>
    %159 = arith.subf %157, %158 : vector<32x8xf32>
    %160 = arith.select %156, %154, %159 : vector<32x8xi1>, vector<32x8xf32>
    %c0_68 = arith.constant 0 : index
    %c0_69 = arith.constant 0 : index
    %161 = vector.load %arg9[%c0_68, %c0_69] : memref<16x16xf32, #tpu.memory_space<vmem>>, vector<16x16xf32>
    %162 = vector.extract_strided_slice %161 {offsets = [0, 0], sizes = [8, 16], strides = [1, 1]} : vector<16x16xf32> to vector<8x16xf32>
    %cst_70 = arith.constant dense<0.000000e+00> : vector<32x16xf32>
    %163 = tpu.matmul %88, %162, %cst_70 {dimension_numbers = #tpu.dot_dimension_numbers<[1], [0], [0], [1], [0, 0, 1, 1], [], []>} : vector<32x8xf32>, vector<8x16xf32>, vector<32x16xf32> -> vector<32x16xf32>
    %164 = vector.extract_strided_slice %161 {offsets = [8, 0], sizes = [8, 16], strides = [1, 1]} : vector<16x16xf32> to vector<8x16xf32>
    %cst_71 = arith.constant dense<0.000000e+00> : vector<32x16xf32>
    %165 = tpu.matmul %160, %164, %cst_71 {dimension_numbers = #tpu.dot_dimension_numbers<[1], [0], [0], [1], [0, 0, 1, 1], [], []>} : vector<32x8xf32>, vector<8x16xf32>, vector<32x16xf32> -> vector<32x16xf32>
    %166 = arith.addf %163, %165 : vector<32x16xf32>
    %167 = vector.extract_strided_slice %166 {offsets = [0, 0], sizes = [16, 16], strides = [1, 1]} : vector<32x16xf32> to vector<16x16xf32>
    %168 = vector.extract_strided_slice %166 {offsets = [16, 0], sizes = [16, 16], strides = [1, 1]} : vector<32x16xf32> to vector<16x16xf32>
    %c0_72 = arith.constant 0 : index
    %169 = memref.load %arg12[%c0_72] : memref<4xf32, #tpu.memory_space<smem>>
    %170 = vector.broadcast %169 : f32 to vector<32x16xf32>
    %171 = arith.mulf %170, %8 : vector<32x16xf32>
    %c1_73 = arith.constant 1 : index
    %172 = memref.load %arg12[%c1_73] : memref<4xf32, #tpu.memory_space<smem>>
    %173 = vector.broadcast %172 : f32 to vector<32x16xf32>
    %174 = arith.mulf %173, %10 : vector<32x16xf32>
    %175 = arith.addf %171, %174 : vector<32x16xf32>
    %c2_74 = arith.constant 2 : index
    %176 = memref.load %arg12[%c2_74] : memref<4xf32, #tpu.memory_space<smem>>
    %177 = vector.broadcast %176 : f32 to vector<32x16xf32>
    %178 = arith.mulf %177, %12 : vector<32x16xf32>
    %179 = arith.addf %175, %178 : vector<32x16xf32>
    %c3_75 = arith.constant 3 : index
    %180 = memref.load %arg12[%c3_75] : memref<4xf32, #tpu.memory_space<smem>>
    %181 = vector.broadcast %180 : f32 to vector<32x16xf32>
    %182 = arith.mulf %181, %14 : vector<32x16xf32>
    %183 = arith.addf %179, %182 : vector<32x16xf32>
    %c0_76 = arith.constant 0 : index
    %c0_77 = arith.constant 0 : index
    %c0_78 = arith.constant 0 : index
    %184 = vector.load %arg10[%c0_76, %c0_77, %c0_78] : memref<1x1x16xf32, #tpu.memory_space<vmem>>, vector<1x1x16xf32>
    %185 = vector.shape_cast %184 : vector<1x1x16xf32> to vector<1x16xf32>
    %cst_79 = arith.constant dense<0.000000e+00> : vector<1x16xf32>
    %186 = tpu.matmul %185, %167, %cst_79 {dimension_numbers = #tpu.dot_dimension_numbers<[1], [1], [0], [0], [0, 0, 1, 0], [], []>} : vector<1x16xf32>, vector<16x16xf32>, vector<1x16xf32> -> vector<1x16xf32>
    %cst_80 = arith.constant dense<0.000000e+00> : vector<1x16xf32>
    %187 = tpu.matmul %185, %168, %cst_80 {dimension_numbers = #tpu.dot_dimension_numbers<[1], [1], [0], [0], [0, 0, 1, 0], [], []>} : vector<1x16xf32>, vector<16x16xf32>, vector<1x16xf32> -> vector<1x16xf32>
    %188 = vector.shape_cast %186 : vector<1x16xf32> to vector<1x16xf32>
    %189 = vector.broadcast %188 : vector<1x16xf32> to vector<16x16xf32>
    %190 = vector.shape_cast %187 : vector<1x16xf32> to vector<1x16xf32>
    %191 = vector.broadcast %190 : vector<1x16xf32> to vector<16x16xf32>
    %192 = tpu.concatenate %189, %191 in 0 : vector<16x16xf32>, vector<16x16xf32> -> vector<32x16xf32>
    %c0_81 = arith.constant 0 : index
    %c0_82 = arith.constant 0 : index
    %c0_83 = arith.constant 0 : index
    %193 = vector.load %arg11[%c0_81, %c0_82, %c0_83] : memref<1x1x16xf32, #tpu.memory_space<vmem>>, vector<1x1x16xf32>
    %194 = vector.shape_cast %193 : vector<1x1x16xf32> to vector<1x16xf32>
    %cst_84 = arith.constant dense<0.000000e+00> : vector<32x1xf32>
    %195 = tpu.matmul %166, %194, %cst_84 {dimension_numbers = #tpu.dot_dimension_numbers<[1], [1], [0], [0], [0, 0, 1, 0], [], []>} : vector<32x16xf32>, vector<1x16xf32>, vector<32x1xf32> -> vector<32x1xf32>
    %196 = vector.broadcast %195 : vector<32x1xf32> to vector<32x16xf32>
    %197 = arith.addf %196, %192 : vector<32x16xf32>
    %198 = arith.addf %197, %183 : vector<32x16xf32>
    %cst_85 = arith.constant 0.000000e+00 : f32
    %199 = vector.broadcast %cst_85 : f32 to vector<32x16xf32>
    %200 = arith.cmpf ogt, %198, %199 : vector<32x16xf32>
    %cst_86 = arith.constant 2.000000e-01 : f32
    %201 = vector.broadcast %cst_86 : f32 to vector<32x16xf32>
    %202 = arith.mulf %201, %198 : vector<32x16xf32>
    %203 = arith.select %200, %198, %202 : vector<32x16xi1>, vector<32x16xf32>
    %204 = arith.select %5, %203, %6 : vector<32x16xi1>, vector<32x16xf32>
    %cst_87 = arith.constant dense<0xFF800000> : vector<32xf32>
    %205 = vector.multi_reduction <maximumf>, %204, %cst_87 [1] : vector<32x16xf32> to vector<32xf32>
    %206 = vector.shape_cast %205 : vector<32xf32> to vector<32x1xf32>
    %207 = vector.broadcast %206 : vector<32x1xf32> to vector<32x16xf32>
    %208 = arith.subf %204, %207 : vector<32x16xf32>
    %209 = math.exp %208 : vector<32x16xf32>
    %cst_88 = arith.constant 0.000000e+00 : f32
    %210 = vector.broadcast %cst_88 : f32 to vector<32x16xf32>
    %211 = arith.select %5, %209, %210 : vector<32x16xi1>, vector<32x16xf32>
    %cst_89 = arith.constant dense<0.000000e+00> : vector<32xf32>
    %212 = vector.multi_reduction <add>, %211, %cst_89 [1] : vector<32x16xf32> to vector<32xf32>
    %213 = vector.shape_cast %212 : vector<32xf32> to vector<32x1xf32>
    %cst_90 = arith.constant 9.99999968E-21 : f32
    %214 = vector.broadcast %cst_90 : f32 to vector<32x1xf32>
    %215 = arith.maximumf %213, %214 : vector<32x1xf32>
    %216 = tpu.reciprocal %215 {approx = true} : vector<32x1xf32> -> vector<32x1xf32>
    %217 = arith.mulf %215, %216 : vector<32x1xf32>
    %cst_91 = arith.constant 2.000000e+00 : f32
    %218 = vector.broadcast %cst_91 : f32 to vector<32x1xf32>
    %219 = arith.subf %218, %217 : vector<32x1xf32>
    %220 = arith.mulf %216, %219 : vector<32x1xf32>
    %221 = vector.broadcast %220 : vector<32x1xf32> to vector<32x16xf32>
    %222 = arith.mulf %211, %221 : vector<32x16xf32>
    %223 = vector.extract_strided_slice %222 {offsets = [0, 0], sizes = [16, 16], strides = [1, 1]} : vector<32x16xf32> to vector<16x16xf32>
    %cst_92 = arith.constant dense<0.000000e+00> : vector<16x16xf32>
    %224 = tpu.matmul %223, %167, %cst_92 {dimension_numbers = #tpu.dot_dimension_numbers<[1], [0], [0], [1], [0, 0, 1, 1], [], []>} : vector<16x16xf32>, vector<16x16xf32>, vector<16x16xf32> -> vector<16x16xf32>
    %225 = vector.extract_strided_slice %222 {offsets = [16, 0], sizes = [16, 16], strides = [1, 1]} : vector<32x16xf32> to vector<16x16xf32>
    %cst_93 = arith.constant dense<0.000000e+00> : vector<16x16xf32>
    %226 = tpu.matmul %225, %168, %cst_93 {dimension_numbers = #tpu.dot_dimension_numbers<[1], [0], [0], [1], [0, 0, 1, 1], [], []>} : vector<16x16xf32>, vector<16x16xf32>, vector<16x16xf32> -> vector<16x16xf32>
    %227 = tpu.concatenate %224, %226 in 0 : vector<16x16xf32>, vector<16x16xf32> -> vector<32x16xf32>
    %c0_94 = arith.constant 0 : index
    %c0_95 = arith.constant 0 : index
    %c0_96 = arith.constant 0 : index
    %228 = vector.load %arg13[%c0_94, %c0_95, %c0_96] : memref<1x1x16xf32, #tpu.memory_space<vmem>>, vector<1x1x16xf32>
    %229 = vector.shape_cast %228 : vector<1x1x16xf32> to vector<1x16xf32>
    %230 = vector.broadcast %229 : vector<1x16xf32> to vector<32x16xf32>
    %231 = arith.addf %227, %230 : vector<32x16xf32>
    %232 = vector.extract_strided_slice %231 {offsets = [0, 0], sizes = [16, 16], strides = [1, 1]} : vector<32x16xf32> to vector<16x16xf32>
    %cst_97 = arith.constant dense<0.000000e+00> : vector<16xf32>
    %233 = vector.multi_reduction <add>, %232, %cst_97 [0] : vector<16x16xf32> to vector<16xf32>
    %234 = vector.shape_cast %233 : vector<16xf32> to vector<1x16xf32>
    %cst_98 = arith.constant 1.600000e+01 : f32
    %235 = vector.broadcast %cst_98 : f32 to vector<1x16xf32>
    %236 = arith.divf %234, %235 : vector<1x16xf32>
    %237 = arith.negf %236 : vector<1x16xf32>
    %238 = math.exp %237 : vector<1x16xf32>
    %cst_99 = arith.constant 1.000000e+00 : f32
    %239 = vector.broadcast %cst_99 : f32 to vector<1x16xf32>
    %240 = arith.addf %239, %238 : vector<1x16xf32>
    %241 = arith.divf %239, %240 : vector<1x16xf32>
    %c0_100 = arith.constant 0 : index
    %c0_101 = arith.constant 0 : index
    %242 = vector.load %arg14[%c0_100, %c0_101] : memref<16x16xf32, #tpu.memory_space<vmem>>, vector<16x16xf32>
    %cst_102 = arith.constant dense<0.000000e+00> : vector<1x16xf32>
    %243 = tpu.matmul %241, %242, %cst_102 {dimension_numbers = #tpu.dot_dimension_numbers<[1], [1], [0], [0], [0, 0, 1, 0], [], []>} : vector<1x16xf32>, vector<16x16xf32>, vector<1x16xf32> -> vector<1x16xf32>
    %cst_103 = arith.constant dense<0.000000e+00> : vector<1x32xf32>
    %244 = tpu.matmul %243, %231, %cst_103 {dimension_numbers = #tpu.dot_dimension_numbers<[1], [1], [0], [0], [0, 0, 1, 0], [], []>} : vector<1x16xf32>, vector<32x16xf32>, vector<1x32xf32> -> vector<1x32xf32>
    %c0_104 = arith.constant 0 : index
    %245 = memref.load %arg15[%c0_104] : memref<1xf32, #tpu.memory_space<smem>>
    %246 = vector.broadcast %245 : f32 to vector<1x32xf32>
    %247 = arith.addf %244, %246 : vector<1x32xf32>
    %c0_105 = arith.constant 0 : index
    %c0_106 = arith.constant 0 : index
    %248 = vector.load %arg16[%c0_105, %c0_106] : memref<1x32xf32, #tpu.memory_space<vmem>>, vector<1x32xf32>
    tpu.vector_store %arg16[%c0_105, %c0_106], %247 {strides = array<i32>} : memref<1x32xf32, #tpu.memory_space<vmem>>, vector<1x32xf32>,
    return
  }
}

</mosaic_0001>

<llo_original>
// kernel: dgi_forward.1
$region0: #{dgi_forward.1}
  #allocation0 [shape = 'u32[]', space=smem, size = 0x4, offset = 0x4, fixed_abs, tag = 'smem constant byte address 0x4 - core index']
  #allocation1 [shape = 'u32[144,128]{1,0:T(1,128)}', space=vmem, size = 0x12000, scoped, tag = 'internal scratch']
  #allocation2 [shape = 'f32[1]{0:T(128)S(6)}', space=smem, size = 0x200, scoped, tag = 'scoped memory for dgi_forward.1']
  %s0 = inlined_call_operand.vmem [shape: f32[16,8], index: 0, kind: input, shape index: {}]
  %s1 = inlined_call_operand.vmem [shape: f32[16,8], index: 1, kind: input, shape index: {}]
  %s2 = inlined_call_operand.vmem [shape: f32[32,16], index: 2, kind: input, shape index: {}]
  %s3 = inlined_call_operand.vmem [shape: f32[4,32,16], index: 3, kind: input, shape index: {}]
  %s4 = inlined_call_operand.vmem [shape: f32[8,16], index: 4, kind: input, shape index: {}]
  %s5 = inlined_call_operand.vmem [shape: f32[2,1,8], index: 5, kind: input, shape index: {}]
  %s6 = inlined_call_operand.vmem [shape: f32[2,1,8], index: 6, kind: input, shape index: {}]
  %s7 = inlined_call_operand.vmem [shape: f32[8], index: 7, kind: input, shape index: {}]
  %s8 = inlined_call_operand.vmem [shape: f32[2,1,8], index: 8, kind: input, shape index: {}]
  %s9 = inlined_call_operand.vmem [shape: f32[16,16], index: 9, kind: input, shape index: {}]
  %s10 = inlined_call_operand.vmem [shape: f32[1,1,16], index: 10, kind: input, shape index: {}]
  %s11 = inlined_call_operand.vmem [shape: f32[1,1,16], index: 11, kind: input, shape index: {}]
  %s12 = inlined_call_operand.vmem [shape: f32[4], index: 12, kind: input, shape index: {}]
  %s13 = inlined_call_operand.vmem [shape: f32[1,1,16], index: 13, kind: input, shape index: {}]
  %s14 = inlined_call_operand.vmem [shape: f32[16,16], index: 14, kind: input, shape index: {}]
  %s15 = inlined_call_operand.<no memory space> [shape: f32[1], index: 15, kind: input, shape index: {}]
  %s16 = inlined_call_operand.hbm [shape: f32[1,32], index: 16, kind: output, shape index: {}]
  %s17 = sld [smem:[#allocation0]]
  $region82: #{dgi_forward.1} parent=0
    _
  %s19 = ssub.s32 1, %s17
  %s20 = scalar_select 0, %s19, %s17
  %21 = sst [smem:[#allocation2]] %s15
  $region1: #{dgi_forward.1} parent=0
    #allocation3 [shape = 'u8[512]{0}', space=smem, size = 0x200, scoped, tag = 'input window, operand 7, single buffered']
    #allocation4 [shape = 's32[1]{0}', space=sflag, size = 0x4, scoped, tag = 'scoped memory for dgi_forward.1']
    #allocation5 [shape = 's32[1]{0}', space=sflag, size = 0x4, scoped, tag = 'scoped memory for dgi_forward.1']
    #allocation6 [shape = 'u8[512]{0}', space=smem, size = 0x200, scoped, tag = 'input window, operand 12, single buffered']
    #allocation7 [shape = 's32[1]{0}', space=sflag, size = 0x4, scoped, tag = 'scoped memory for dgi_forward.1']
    #allocation8 [shape = 'u8[512]{0}', space=vmem, size = 0x400, scoped, tag = 'output window, operand 0, single buffered']
    %22 = vsyncpa [#allocation5], 0
    %23 = vsyncpa [#allocation7], 0
    %24 = vsyncpa [#allocation4], 0
    // Predicated region
    $region2: #{dgi_forward.1} parent=1 // pred_check
      _
    $region3: #{dgi_forward.1} parent=1 // pred_check_branch
      %26 = sbr.rel (0) target = $region5
    $region4: #{dgi_forward.1} parent=1 // pred_region
      _
    $region5: #{dgi_forward.1} parent=1 // pred_fallthru
      _
    // Predicated region
    $region6: #{dgi_forward.1} parent=1 // pred_check
      _
    $region7: #{dgi_forward.1} parent=1 // pred_check_branch
      %28 = sbr.rel (0) target = $region9
    $region8: #{dgi_forward.1} parent=1 // pred_region
      _
    $region9: #{dgi_forward.1} parent=1 // pred_fallthru
      _
    // Predicated region
    $region10: #{dgi_forward.1} parent=1 // pred_check
      _
    $region11: #{dgi_forward.1} parent=1 // pred_check_branch
      %30 = sbr.rel (0) target = $region13
    $region12: #{dgi_forward.1} parent=1 // pred_region
      _
    $region13: #{dgi_forward.1} parent=1 // pred_fallthru
      _
    // Predicated region
    $region14: #{dgi_forward.1} parent=1 // pred_check
      _
    $region15: #{dgi_forward.1} parent=1 // pred_check_branch
      %32 = sbr.rel (0) target = $region17
    $region16: #{dgi_forward.1} parent=1 // pred_region
      _
    $region17: #{dgi_forward.1} parent=1 // pred_fallthru
      _
    // Predicated region
    $region18: #{dgi_forward.1} parent=1 // pred_check
      _
    $region19: #{dgi_forward.1} parent=1 // pred_check_branch
      %34 = sbr.rel (0) target = $region21
    $region20: #{dgi_forward.1} parent=1 // pred_region
      _
    $region21: #{dgi_forward.1} parent=1 // pred_fallthru
      _
    // Predicated region
    $region22: #{dgi_forward.1} parent=1 // pred_check
      _
    $region23: #{dgi_forward.1} parent=1 // pred_check_branch
      %36 = sbr.rel (0) target = $region25
    $region24: #{dgi_forward.1} parent=1 // pred_region
      _
    $region25: #{dgi_forward.1} parent=1 // pred_fallthru
      _
    // Predicated region
    $region26: #{dgi_forward.1} parent=1 // pred_check
      _
    $region27: #{dgi_forward.1} parent=1 // pred_check_branch
      %38 = sbr.rel (0) target = $region29
    $region28: #{dgi_forward.1} parent=1 // pred_region
      _
    $region29: #{dgi_forward.1} parent=1 // pred_fallthru
      _
    // Predicated region
    $region30: #{dgi_forward.1} parent=1 // pred_check
      _
    $region31: #{dgi_forward.1} parent=1 // pred_check_branch
      %40 = sbr.rel (0) target = $region33
    $region32: #{dgi_forward.1} parent=1 // pred_region
      %s42 = ssub.s32 16, 16
      %43 = vsyncadd [#allocation5], %s42
      %s45 = sshll.u32 %s7, 4
      %s46 = int_to_ptr.vmem [resolvable:$true] %s45
      %48 = dma.vmem_to_smem %s46, 16, [#allocation3], [#allocation5]
    $region33: #{dgi_forward.1} parent=1 // pred_fallthru
      _
    // Predicated region
    $region34: #{dgi_forward.1} parent=1 // pred_check
      _
    $region35: #{dgi_forward.1} parent=1 // pred_check_branch
      %50 = sbr.rel (0) target = $region37
    $region36: #{dgi_forward.1} parent=1 // pred_region
      _
    $region37: #{dgi_forward.1} parent=1 // pred_fallthru
      _
    // Predicated region
    $region38: #{dgi_forward.1} parent=1 // pred_check
      _
    $region39: #{dgi_forward.1} parent=1 // pred_check_branch
      %52 = sbr.rel (0) target = $region41
    $region40: #{dgi_forward.1} parent=1 // pred_region
      _
    $region41: #{dgi_forward.1} parent=1 // pred_fallthru
      _
    // Predicated region
    $region42: #{dgi_forward.1} parent=1 // pred_check
      _
    $region43: #{dgi_forward.1} parent=1 // pred_check_branch
      %54 = sbr.rel (0) target = $region45
    $region44: #{dgi_forward.1} parent=1 // pred_region
      _
    $region45: #{dgi_forward.1} parent=1 // pred_fallthru
      _
    // Predicated region
    $region46: #{dgi_forward.1} parent=1 // pred_check
      _
    $region47: #{dgi_forward.1} parent=1 // pred_check_branch
      %56 = sbr.rel (0) target = $region49
    $region48: #{dgi_forward.1} parent=1 // pred_region
      _
    $region49: #{dgi_forward.1} parent=1 // pred_fallthru
      _
    // Predicated region
    $region50: #{dgi_forward.1} parent=1 // pred_check
      _
    $region51: #{dgi_forward.1} parent=1 // pred_check_branch
      %58 = sbr.rel (0) target = $region53
    $region52: #{dgi_forward.1} parent=1 // pred_region
      %s60 = ssub.s32 16, 16
      %61 = vsyncadd [#allocation7], %s60
      %s63 = sshll.u32 %s12, 4
      %s64 = int_to_ptr.vmem [resolvable:$true] %s63
      %66 = dma.vmem_to_smem %s64, 16, [#allocation6], [#allocation7]
    $region53: #{dgi_forward.1} parent=1 // pred_fallthru
      _
    // Predicated region
    $region54: #{dgi_forward.1} parent=1 // pred_check
      _
    $region55: #{dgi_forward.1} parent=1 // pred_check_branch
      %68 = sbr.rel (0) target = $region57
    $region56: #{dgi_forward.1} parent=1 // pred_region
      _
    $region57: #{dgi_forward.1} parent=1 // pred_fallthru
      _
    // Predicated region
    $region58: #{dgi_forward.1} parent=1 // pred_check
      _
    $region59: #{dgi_forward.1} parent=1 // pred_check_branch
      %70 = sbr.rel (0) target = $region61
    $region60: #{dgi_forward.1} parent=1 // pred_region
      _
    $region61: #{dgi_forward.1} parent=1 // pred_fallthru
      _
    // Predicated region
    $region62: #{dgi_forward.1} parent=1 // pred_check
      _
    $region63: #{dgi_forward.1} parent=1 // pred_check_branch
      %72 = sbr.rel (0) target = $region65
    $region64: #{dgi_forward.1} parent=1 // pred_region
      _
    $region65: #{dgi_forward.1} parent=1 // pred_fallthru
      _
    // Predicated region
    $region66: #{dgi_forward.1} parent=1 // pred_check
      _
    $region67: #{dgi_forward.1} parent=1 // pred_check_branch
      %74 = sbr.rel (0) target = $region69
    $region68: #{dgi_forward.1} parent=1 // pred_region
      %75 = dma.done [#allocation5], 16
    $region69: #{dgi_forward.1} parent=1 // pred_fallthru
      _
    // Predicated region
    $region70: #{dgi_forward.1} parent=1 // pred_check
      _
    $region71: #{dgi_forward.1} parent=1 // pred_check_branch
      %77 = sbr.rel (0) target = $region73
    $region72: #{dgi_forward.1} parent=1 // pred_region
      %78 = dma.done [#allocation7], 16
    $region73: #{dgi_forward.1} parent=1 // pred_fallthru
      _
    %79 = sfence
    %v80 = vld [vmem:[%s0] sm:$0xff]
    %v81 = vld [vmem:[%s0 + $0x8] sm:$0xff]
    %v82 = vld [vmem:[%s1] sm:$0xff]
    %v83 = vld [vmem:[%s1 + $0x8] sm:$0xff]
    %v84 = vld [vmem:[%s2] sm:$0xff]
    %v85 = vld [vmem:[%s2 + $0x8] sm:$0xff]
    %v86 = vld [vmem:[%s2 + $0x10] sm:$0xff]
    %v87 = vld [vmem:[%s2 + $0x18] sm:$0xff]
    %vm88 = vcmp.gt.f32.partialorder %v84, 0.0
    %vm89 = vcmp.gt.f32.partialorder %v85, 0.0
    %vm90 = vcmp.gt.f32.partialorder %v86, 0.0
    %vm91 = vcmp.gt.f32.partialorder %v87, 0.0
    %v92 = vld [vmem:[%s3] sm:$0xff]
    %v93 = vld [vmem:[%s3 + $0x8] sm:$0xff]
    %v94 = vld [vmem:[%s3 + $0x10] sm:$0xff]
    %v95 = vld [vmem:[%s3 + $0x18] sm:$0xff]
    %s96 = scalar_lea.vmem %s3, 32
    %v97 = vld [vmem:[%s96] sm:$0xff]
    %v98 = vld [vmem:[%s96 + $0x8] sm:$0xff]
    %v99 = vld [vmem:[%s96 + $0x10] sm:$0xff]
    %v100 = vld [vmem:[%s96 + $0x18] sm:$0xff]
    %s101 = scalar_lea.vmem %s3, 64
    %v102 = vld [vmem:[%s101] sm:$0xff]
    %v103 = vld [vmem:[%s101 + $0x8] sm:$0xff]
    %v104 = vld [vmem:[%s101 + $0x10] sm:$0xff]
    %v105 = vld [vmem:[%s101 + $0x18] sm:$0xff]
    %s106 = scalar_lea.vmem %s3, 96
    %v107 = vld [vmem:[%s106] sm:$0xff]
    %v108 = vld [vmem:[%s106 + $0x8] sm:$0xff]
    %v109 = vld [vmem:[%s106 + $0x10] sm:$0xff]
    %v110 = vld [vmem:[%s106 + $0x18] sm:$0xff]
    %v111 = vld [vmem:[%s4] sm:$0xff]
    %vm112 = vcmask 64512
    %v114 = vsel %vm112, %v80, 0
    %v117 = vsel %vm112, %v81, 0
    %v120 = vsel %vm112, %v82, 0
    %v123 = vsel %vm112, %v83, 0
    %125 = vmatprep.subr.mxu0 0.0
    %126 = vmatpush1.msra.mxu0 0.0
    %127 = vmatprep.subr.mxu0 0.0
    %128 = vmatpush1.msra.mxu0 0.0
    %129 = vmatprep.subr.mxu0 0.0
    %130 = vmatpush1.msra.mxu0 0.0
    %131 = vmatprep.subr.mxu0 0.0
    %132 = vmatpush1.msra.mxu0 0.0
    %133 = vmatprep.subr.mxu0 0.0
    %134 = vmatpush1.msra.mxu0 0.0
    %135 = vmatprep.subr.mxu0 0.0
    %136 = vmatpush1.msra.mxu0 0.0
    %137 = vmatprep.subr.mxu0 0.0
    %138 = vmatpush1.msra.mxu0 0.0
    %139 = vmatprep.subr.mxu0 0.0
    %140 = vmatpush1.msra.mxu0 0.0
    %141 = vmatprep.subr.mxu0 0.0
    %142 = vmatpush1.msra.mxu0 0.0
    %143 = vmatprep.subr.mxu0 0.0
    %144 = vmatpush1.msra.mxu0 0.0
    %145 = vmatprep.subr.mxu0 0.0
    %146 = vmatpush1.msra.mxu0 0.0
    %147 = vmatprep.subr.mxu0 0.0
    %148 = vmatpush1.msra.mxu0 0.0
    %149 = vmatprep.subr.mxu0 0.0
    %150 = vmatpush1.msra.mxu0 0.0
    %151 = vmatprep.subr.mxu0 0.0
    %152 = vmatpush1.msra.mxu0 0.0
    %153 = vmatprep.subr.mxu0 0.0
    %154 = vmatpush1.msra.mxu0 0.0
    %155 = vmatprep.subr.mxu0 0.0
    %156 = vmatpush1.msra.mxu0 %v111
    %157 = vmatprep.subr.mxu0 0.0
    %158 = vmatpush2.msra.mxu0 0.0
    %159 = vmatprep.subr.mxu0 0.0
    %160 = vmatpush2.msra.mxu0 0.0
    %161 = vmatprep.subr.mxu0 0.0
    %162 = vmatpush2.msra.mxu0 0.0
    %163 = vmatprep.subr.mxu0 0.0
    %164 = vmatpush2.msra.mxu0 0.0
    %165 = vmatprep.subr.mxu0 0.0
    %166 = vmatpush2.msra.mxu0 0.0
    %167 = vmatprep.subr.mxu0 0.0
    %168 = vmatpush2.msra.mxu0 0.0
    %169 = vmatprep.subr.mxu0 0.0
    %170 = vmatpush2.msra.mxu0 0.0
    %171 = vmatprep.subr.mxu0 0.0
    %172 = vmatpush2.msra.mxu0 0.0
    %173 = vmatprep.subr.mxu0 0.0
    %174 = vmatpush2.msra.mxu0 0.0
    %175 = vmatprep.subr.mxu0 0.0
    %176 = vmatpush2.msra.mxu0 0.0
    %177 = vmatprep.subr.mxu0 0.0
    %178 = vmatpush2.msra.mxu0 0.0
    %179 = vmatprep.subr.mxu0 0.0
    %180 = vmatpush2.msra.mxu0 0.0
    %181 = vmatprep.subr.mxu0 0.0
    %182 = vmatpush2.msra.mxu0 0.0
    %183 = vmatprep.subr.mxu0 0.0
    %184 = vmatpush2.msra.mxu0 0.0
    %185 = vmatprep.subr.mxu0 0.0
    %186 = vmatpush2.msra.mxu0 0.0
    %187 = vmatprep.subr.mxu0 0.0
    %188 = vmatpush2.msra.mxu0 0.0
    %189 = vmatprep.mubr.f32.mxu0 0.0
    %190 = vmatmul.mubr.f32.gmra.mxu0 %v114
    %v191 = vpop.f32.mrf.mxu0
    %v192 = vadd.f32 0.0, %v191
    %v193 = vpop.f32.mrf.mxu0
    %194 = vmatprep.mubr.f32.mxu0 0.0
    %195 = vmatmul.mubr.f32.gmra.mxu0 %v117
    %v196 = vpop.f32.mrf.mxu0
    %v197 = vadd.f32 0.0, %v196
    %v198 = vpop.f32.mrf.mxu0
    %199 = vmatprep.mubr.f32.mxu0 0.0
    %200 = vmatmul.mubr.f32.gmra.mxu0 %v120
    %v201 = vpop.f32.mrf.mxu0
    %v202 = vadd.f32 0.0, %v201
    %v203 = vpop.f32.mrf.mxu0
    %204 = vmatprep.mubr.f32.mxu0 0.0
    %205 = vmatmul.mubr.f32.gmra.mxu0 %v123
    %v206 = vpop.f32.mrf.mxu0
    %v207 = vadd.f32 0.0, %v206
    %v208 = vpop.f32.mrf.mxu0
    %209 = vdwg.mxu0
    %s210 = sld [smem:[#allocation3]]
    %v211 = vstv %s210
    %v212 = vmul.f32 %v211, %v92
    %v213 = vmul.f32 %v211, %v93
    %v214 = vmul.f32 %v211, %v94
    %v215 = vmul.f32 %v211, %v95
    %s216 = sld [smem:[#allocation3 + $0x1]]
    %v217 = vstv %s216
    %v218 = vmul.f32 %v217, %v97
    %v219 = vmul.f32 %v217, %v98
    %v220 = vmul.f32 %v217, %v99
    %v221 = vmul.f32 %v217, %v100
    %v222 = vadd.f32 %v212, %v218
    %v223 = vadd.f32 %v213, %v219
    %v224 = vadd.f32 %v214, %v220
    %v225 = vadd.f32 %v215, %v221
    %s226 = sld [smem:[#allocation3 + $0x2]]
    %v227 = vstv %s226
    %v228 = vmul.f32 %v227, %v102
    %v229 = vmul.f32 %v227, %v103
    %v230 = vmul.f32 %v227, %v104
    %v231 = vmul.f32 %v227, %v105
    %v232 = vadd.f32 %v222, %v228
    %v233 = vadd.f32 %v223, %v229
    %v234 = vadd.f32 %v224, %v230
    %v235 = vadd.f32 %v225, %v231
    %s236 = sld [smem:[#allocation3 + $0x3]]
    %v237 = vstv %s236
    %v238 = vmul.f32 %v237, %v107
    %v239 = vmul.f32 %v237, %v108
    %v240 = vmul.f32 %v237, %v109
    %v241 = vmul.f32 %v237, %v110
    %v242 = vadd.f32 %v232, %v238
    %v243 = vadd.f32 %v233, %v239
    %v244 = vadd.f32 %v234, %v240
    %v245 = vadd.f32 %v235, %v241
    %v246 = vld [vmem:[%s5] sm:$0x1]
    %v248 = vsel %vm112, %v246, 0
    %v251 = vsel %vm112, %v192, 0
    %v254 = vsel %vm112, %v197, 0
    %256 = vmatprep.subr.mxu0 0.0
    %257 = vmatpush1.xpose.msra.mxu0 0.0
    %258 = vmatprep.subr.mxu0 0.0
    %259 = vmatpush1.xpose.msra.mxu0 0.0
    %260 = vmatprep.subr.mxu0 0.0
    %261 = vmatpush1.xpose.msra.mxu0 0.0
    %262 = vmatprep.subr.mxu0 0.0
    %263 = vmatpush1.xpose.msra.mxu0 0.0
    %264 = vmatprep.subr.mxu0 0.0
    %265 = vmatpush1.xpose.msra.mxu0 0.0
    %266 = vmatprep.subr.mxu0 0.0
    %267 = vmatpush1.xpose.msra.mxu0 0.0
    %268 = vmatprep.subr.mxu0 0.0
    %269 = vmatpush1.xpose.msra.mxu0 0.0
    %270 = vmatprep.subr.mxu0 0.0
    %271 = vmatpush1.xpose.msra.mxu0 0.0
    %272 = vmatprep.subr.mxu0 0.0
    %273 = vmatpush1.xpose.msra.mxu0 0.0
    %274 = vmatprep.subr.mxu0 0.0
    %275 = vmatpush1.xpose.msra.mxu0 0.0
    %276 = vmatprep.subr.mxu0 0.0
    %277 = vmatpush1.xpose.msra.mxu0 0.0
    %278 = vmatprep.subr.mxu0 0.0
    %279 = vmatpush1.xpose.msra.mxu0 0.0
    %280 = vmatprep.subr.mxu0 0.0
    %281 = vmatpush1.xpose.msra.mxu0 0.0
    %282 = vmatprep.subr.mxu0 0.0
    %283 = vmatpush1.xpose.msra.mxu0 0.0
    %284 = vmatprep.subr.mxu0 0.0
    %285 = vmatpush1.xpose.msra.mxu0 %v254
    %286 = vmatprep.subr.mxu0 0.0
    %287 = vmatpush1.xpose.msra.mxu0 %v251
    %288 = vmatprep.subr.mxu0 0.0
    %289 = vmatpush2.xpose.msra.mxu0 0.0
    %290 = vmatprep.subr.mxu0 0.0
    %291 = vmatpush2.xpose.msra.mxu0 0.0
    %292 = vmatprep.subr.mxu0 0.0
    %293 = vmatpush2.xpose.msra.mxu0 0.0
    %294 = vmatprep.subr.mxu0 0.0
    %295 = vmatpush2.xpose.msra.mxu0 0.0
    %296 = vmatprep.subr.mxu0 0.0
    %297 = vmatpush2.xpose.msra.mxu0 0.0
    %298 = vmatprep.subr.mxu0 0.0
    %299 = vmatpush2.xpose.msra.mxu0 0.0
    %300 = vmatprep.subr.mxu0 0.0
    %301 = vmatpush2.xpose.msra.mxu0 0.0
    %302 = vmatprep.subr.mxu0 0.0
    %303 = vmatpush2.xpose.msra.mxu0 0.0
    %304 = vmatprep.subr.mxu0 0.0
    %305 = vmatpush2.xpose.msra.mxu0 0.0
    %306 = vmatprep.subr.mxu0 0.0
    %307 = vmatpush2.xpose.msra.mxu0 0.0
    %308 = vmatprep.subr.mxu0 0.0
    %309 = vmatpush2.xpose.msra.mxu0 0.0
    %310 = vmatprep.subr.mxu0 0.0
    %311 = vmatpush2.xpose.msra.mxu0 0.0
    %312 = vmatprep.subr.mxu0 0.0
    %313 = vmatpush2.xpose.msra.mxu0 0.0
    %314 = vmatprep.subr.mxu0 0.0
    %315 = vmatpush2.xpose.msra.mxu0 0.0
    %316 = vmatprep.subr.mxu0 0.0
    %317 = vmatpush2.xpose.msra.mxu0 0.0
    %318 = vmatprep.subr.mxu0 0.0
    %319 = vmatpush2.xpose.msra.mxu0 0.0
    %320 = vmatprep.mubr.f32.mxu0 0.0
    %321 = vmatmul.mubr.f32.gmra.mxu0 %v248
    %v322 = vpop.f32.mrf.mxu0
    %v323 = vadd.f32 0.0, %v322
    %v324 = vpop.f32.mrf.mxu0
    %325 = vdwg.mxu0
    %v327 = vsel %vm112, %v202, 0
    %v330 = vsel %vm112, %v207, 0
    %332 = vmatprep.subr.mxu0 0.0
    %333 = vmatpush1.xpose.msra.mxu0 0.0
    %334 = vmatprep.subr.mxu0 0.0
    %335 = vmatpush1.xpose.msra.mxu0 0.0
    %336 = vmatprep.subr.mxu0 0.0
    %337 = vmatpush1.xpose.msra.mxu0 0.0
    %338 = vmatprep.subr.mxu0 0.0
    %339 = vmatpush1.xpose.msra.mxu0 0.0
    %340 = vmatprep.subr.mxu0 0.0
    %341 = vmatpush1.xpose.msra.mxu0 0.0
    %342 = vmatprep.subr.mxu0 0.0
    %343 = vmatpush1.xpose.msra.mxu0 0.0
    %344 = vmatprep.subr.mxu0 0.0
    %345 = vmatpush1.xpose.msra.mxu0 0.0
    %346 = vmatprep.subr.mxu0 0.0
    %347 = vmatpush1.xpose.msra.mxu0 0.0
    %348 = vmatprep.subr.mxu0 0.0
    %349 = vmatpush1.xpose.msra.mxu0 0.0
    %350 = vmatprep.subr.mxu0 0.0
    %351 = vmatpush1.xpose.msra.mxu0 0.0
    %352 = vmatprep.subr.mxu0 0.0
    %353 = vmatpush1.xpose.msra.mxu0 0.0
    %354 = vmatprep.subr.mxu0 0.0
    %355 = vmatpush1.xpose.msra.mxu0 0.0
    %356 = vmatprep.subr.mxu0 0.0
    %357 = vmatpush1.xpose.msra.mxu0 0.0
    %358 = vmatprep.subr.mxu0 0.0
    %359 = vmatpush1.xpose.msra.mxu0 0.0
    %360 = vmatprep.subr.mxu0 0.0
    %361 = vmatpush1.xpose.msra.mxu0 %v330
    %362 = vmatprep.subr.mxu0 0.0
    %363 = vmatpush1.xpose.msra.mxu0 %v327
    %364 = vmatprep.subr.mxu0 0.0
    %365 = vmatpush2.xpose.msra.mxu0 0.0
    %366 = vmatprep.subr.mxu0 0.0
    %367 = vmatpush2.xpose.msra.mxu0 0.0
    %368 = vmatprep.subr.mxu0 0.0
    %369 = vmatpush2.xpose.msra.mxu0 0.0
    %370 = vmatprep.subr.mxu0 0.0
    %371 = vmatpush2.xpose.msra.mxu0 0.0
    %372 = vmatprep.subr.mxu0 0.0
    %373 = vmatpush2.xpose.msra.mxu0 0.0
    %374 = vmatprep.subr.mxu0 0.0
    %375 = vmatpush2.xpose.msra.mxu0 0.0
    %376 = vmatprep.subr.mxu0 0.0
    %377 = vmatpush2.xpose.msra.mxu0 0.0
    %378 = vmatprep.subr.mxu0 0.0
    %379 = vmatpush2.xpose.msra.mxu0 0.0
    %380 = vmatprep.subr.mxu0 0.0
    %381 = vmatpush2.xpose.msra.mxu0 0.0
    %382 = vmatprep.subr.mxu0 0.0
    %383 = vmatpush2.xpose.msra.mxu0 0.0
    %384 = vmatprep.subr.mxu0 0.0
    %385 = vmatpush2.xpose.msra.mxu0 0.0
    %386 = vmatprep.subr.mxu0 0.0
    %387 = vmatpush2.xpose.msra.mxu0 0.0
    %388 = vmatprep.subr.mxu0 0.0
    %389 = vmatpush2.xpose.msra.mxu0 0.0
    %390 = vmatprep.subr.mxu0 0.0
    %391 = vmatpush2.xpose.msra.mxu0 0.0
    %392 = vmatprep.subr.mxu0 0.0
    %393 = vmatpush2.xpose.msra.mxu0 0.0
    %394 = vmatprep.subr.mxu0 0.0
    %395 = vmatpush2.xpose.msra.mxu0 0.0
    %396 = vmatprep.mubr.f32.mxu0 0.0
    %397 = vmatmul.mubr.f32.gmra.mxu0 %v248
    %v398 = vpop.f32.mrf.mxu0
    %v399 = vadd.f32 0.0, %v398
    %v400 = vpop.f32.mrf.mxu0
    %401 = vdwg.mxu0
    %v402 = vlaneseq
    %v403 = vshrl.u32 %v402, 7
    %v404 = vsub.s32 0, %v403
    %v405 = vrot.slane %v323, %v404
    %v406 = vlaneseq
    %v407 = vshrl.u32 %v406, 7
    %v408 = vsub.s32 0, %v407
    %v409 = vrot.slane %v399, %v408
    %v410 = vld [vmem:[%s6] sm:$0x1]
    %v412 = vlaneseq
    %v413 = vshrl.u32 %v412, 7
    %v414 = vsub.s32 0, %v413
    %v415 = vrot.slane %v410, %v414
    %v417 = vmul.f32 %v192, %v415
    %v418 = vmul.f32 %v197, %v415
    %v419 = vmul.f32 %v202, %v415
    %v420 = vmul.f32 %v207, %v415
    %v421 = vsel %vm112, %v417, 0.0
    %422 = vadd.xlane.f32.xlu0 %v421
    %v423 = vpop.xlane.xlu0 %422
    %v424 = vsel %vm112, %v418, 0.0
    %425 = vadd.xlane.f32.xlu0 %v424
    %v426 = vpop.xlane.xlu0 %425
    %v427 = vsel %vm112, %v419, 0.0
    %428 = vadd.xlane.f32.xlu0 %v427
    %v429 = vpop.xlane.xlu0 %428
    %v430 = vsel %vm112, %v420, 0.0
    %431 = vadd.xlane.f32.xlu0 %v430
    %v432 = vpop.xlane.xlu0 %431
    %v433 = vadd.f32 %v423, %v405
    %v434 = vadd.f32 %v426, %v405
    %v435 = vadd.f32 %v429, %v409
    %v436 = vadd.f32 %v432, %v409
    %v437 = vadd.f32 %v433, %v242
    %v438 = vadd.f32 %v434, %v243
    %v439 = vadd.f32 %v435, %v244
    %v440 = vadd.f32 %v436, %v245
    %vm441 = vcmp.gt.f32.partialorder %v437, 0.0
    %vm442 = vcmp.gt.f32.partialorder %v438, 0.0
    %vm443 = vcmp.gt.f32.partialorder %v439, 0.0
    %vm444 = vcmp.gt.f32.partialorder %v440, 0.0
    %v445 = vmul.f32 %v437, 0.2
    %v446 = vmul.f32 %v438, 0.2
    %v447 = vmul.f32 %v439, 0.2
    %v448 = vmul.f32 %v440, 0.2
    %v449 = vsel %vm441, %v437, %v445
    %v450 = vsel %vm442, %v438, %v446
    %v451 = vsel %vm443, %v439, %v447
    %v452 = vsel %vm444, %v440, %v448
    %v453 = vsel %vm88, %v449, -1e+30
    %v454 = vsel %vm89, %v450, -1e+30
    %v455 = vsel %vm90, %v451, -1e+30
    %v456 = vsel %vm91, %v452, -1e+30
    %vm457 = vcmask 130048
    %v458 = vsel %vm457, %v453, -inf
    %459 = vmax.xlane.f32.xlu0 %v458
    %v460 = vpop.xlane.xlu0 %459
    %v461 = vsel %vm457, %v454, -inf
    %462 = vmax.xlane.f32.xlu0 %v461
    %v463 = vpop.xlane.xlu0 %462
    %v464 = vsel %vm457, %v455, -inf
    %465 = vmax.xlane.f32.xlu0 %v464
    %v466 = vpop.xlane.xlu0 %465
    %v467 = vsel %vm457, %v456, -inf
    %468 = vmax.xlane.f32.xlu0 %v467
    %v469 = vpop.xlane.xlu0 %468
    %v470 = vsub.f32 %v453, %v460
    %v471 = vsub.f32 %v454, %v463
    %v472 = vsub.f32 %v455, %v466
    %v473 = vsub.f32 %v456, %v469
    %v474 = vmul.f32 %v470, 1.442695
    %v475 = vpow.pop %v474
    %v476 = vmul.f32 %v471, 1.442695
    %v477 = vpow.pop %v476
    %v478 = vmul.f32 %v472, 1.442695
    %v479 = vpow.pop %v478
    %v480 = vmul.f32 %v473, 1.442695
    %v481 = vpow.pop %v480
    %v482 = vsel %vm88, %v475, 0.0
    %v483 = vsel %vm89, %v477, 0.0
    %v484 = vsel %vm90, %v479, 0.0
    %v485 = vsel %vm91, %v481, 0.0
    %v486 = vsel %vm457, %v482, 0.0
    %487 = vadd.xlane.f32.xlu0 %v486
    %v488 = vpop.xlane.xlu0 %487
    %v489 = vsel %vm457, %v483, 0.0
    %490 = vadd.xlane.f32.xlu0 %v489
    %v491 = vpop.xlane.xlu0 %490
    %v492 = vsel %vm457, %v484, 0.0
    %493 = vadd.xlane.f32.xlu0 %v492
    %v494 = vpop.xlane.xlu0 %493
    %v495 = vsel %vm457, %v485, 0.0
    %496 = vadd.xlane.f32.xlu0 %v495
    %v497 = vpop.xlane.xlu0 %496
    %v498 = vmax.f32 %v488, 1e-20
    %v499 = vmax.f32 %v491, 1e-20
    %v500 = vmax.f32 %v494, 1e-20
    %v501 = vmax.f32 %v497, 1e-20
    %v502 = vrcp.pop %v498
    %v503 = vrcp.pop %v499
    %v504 = vrcp.pop %v500
    %v505 = vrcp.pop %v501
    %v506 = vmul.f32 %v498, %v502
    %v507 = vmul.f32 %v499, %v503
    %v508 = vmul.f32 %v500, %v504
    %v509 = vmul.f32 %v501, %v505
    %v510 = vsub.f32 2.0, %v506
    %v511 = vsub.f32 2.0, %v507
    %v512 = vsub.f32 2.0, %v508
    %v513 = vsub.f32 2.0, %v509
    %v514 = vmul.f32 %v502, %v510
    %v515 = vmul.f32 %v503, %v511
    %v516 = vmul.f32 %v504, %v512
    %v517 = vmul.f32 %v505, %v513
    %v518 = vmul.f32 %v482, %v514
    %v519 = vmul.f32 %v483, %v515
    %v520 = vmul.f32 %v484, %v516
    %v521 = vmul.f32 %v485, %v517
    %v523 = vsel %vm457, %v518, 0
    %v526 = vsel %vm457, %v519, 0
    %528 = vmatprep.subr.mxu0 0.0
    %529 = vmatpush1.msra.mxu0 0.0
    %530 = vmatprep.subr.mxu0 0.0
    %531 = vmatpush1.msra.mxu0 0.0
    %532 = vmatprep.subr.mxu0 0.0
    %533 = vmatpush1.msra.mxu0 0.0
    %534 = vmatprep.subr.mxu0 0.0
    %535 = vmatpush1.msra.mxu0 0.0
    %536 = vmatprep.subr.mxu0 0.0
    %537 = vmatpush1.msra.mxu0 0.0
    %538 = vmatprep.subr.mxu0 0.0
    %539 = vmatpush1.msra.mxu0 0.0
    %540 = vmatprep.subr.mxu0 0.0
    %541 = vmatpush1.msra.mxu0 0.0
    %542 = vmatprep.subr.mxu0 0.0
    %543 = vmatpush1.msra.mxu0 0.0
    %544 = vmatprep.subr.mxu0 0.0
    %545 = vmatpush1.msra.mxu0 0.0
    %546 = vmatprep.subr.mxu0 0.0
    %547 = vmatpush1.msra.mxu0 0.0
    %548 = vmatprep.subr.mxu0 0.0
    %549 = vmatpush1.msra.mxu0 0.0
    %550 = vmatprep.subr.mxu0 0.0
    %551 = vmatpush1.msra.mxu0 0.0
    %552 = vmatprep.subr.mxu0 0.0
    %553 = vmatpush1.msra.mxu0 0.0
    %554 = vmatprep.subr.mxu0 0.0
    %555 = vmatpush1.msra.mxu0 0.0
    %556 = vmatprep.subr.mxu0 0.0
    %557 = vmatpush1.msra.mxu0 %v197
    %558 = vmatprep.subr.mxu0 0.0
    %559 = vmatpush1.msra.mxu0 %v192
    %560 = vmatprep.subr.mxu0 0.0
    %561 = vmatpush2.msra.mxu0 0.0
    %562 = vmatprep.subr.mxu0 0.0
    %563 = vmatpush2.msra.mxu0 0.0
    %564 = vmatprep.subr.mxu0 0.0
    %565 = vmatpush2.msra.mxu0 0.0
    %566 = vmatprep.subr.mxu0 0.0
    %567 = vmatpush2.msra.mxu0 0.0
    %568 = vmatprep.subr.mxu0 0.0
    %569 = vmatpush2.msra.mxu0 0.0
    %570 = vmatprep.subr.mxu0 0.0
    %571 = vmatpush2.msra.mxu0 0.0
    %572 = vmatprep.subr.mxu0 0.0
    %573 = vmatpush2.msra.mxu0 0.0
    %574 = vmatprep.subr.mxu0 0.0
    %575 = vmatpush2.msra.mxu0 0.0
    %576 = vmatprep.subr.mxu0 0.0
    %577 = vmatpush2.msra.mxu0 0.0
    %578 = vmatprep.subr.mxu0 0.0
    %579 = vmatpush2.msra.mxu0 0.0
    %580 = vmatprep.subr.mxu0 0.0
    %581 = vmatpush2.msra.mxu0 0.0
    %582 = vmatprep.subr.mxu0 0.0
    %583 = vmatpush2.msra.mxu0 0.0
    %584 = vmatprep.subr.mxu0 0.0
    %585 = vmatpush2.msra.mxu0 0.0
    %586 = vmatprep.subr.mxu0 0.0
    %587 = vmatpush2.msra.mxu0 0.0
    %588 = vmatprep.subr.mxu0 0.0
    %589 = vmatpush2.msra.mxu0 0.0
    %590 = vmatprep.subr.mxu0 0.0
    %591 = vmatpush2.msra.mxu0 0.0
    %592 = vmatprep.mubr.f32.mxu0 0.0
    %593 = vmatmul.mubr.f32.gmra.mxu0 %v523
    %v594 = vpop.f32.mrf.mxu0
    %v595 = vadd.f32 0.0, %v594
    %v596 = vpop.f32.mrf.mxu0
    %597 = vmatprep.mubr.f32.mxu0 0.0
    %598 = vmatmul.mubr.f32.gmra.mxu0 %v526
    %v599 = vpop.f32.mrf.mxu0
    %v600 = vadd.f32 0.0, %v599
    %v601 = vpop.f32.mrf.mxu0
    %602 = vdwg.mxu0
    %v604 = vsel %vm457, %v520, 0
    %v607 = vsel %vm457, %v521, 0
    %609 = vmatprep.subr.mxu0 0.0
    %610 = vmatpush1.msra.mxu0 0.0
    %611 = vmatprep.subr.mxu0 0.0
    %612 = vmatpush1.msra.mxu0 0.0
    %613 = vmatprep.subr.mxu0 0.0
    %614 = vmatpush1.msra.mxu0 0.0
    %615 = vmatprep.subr.mxu0 0.0
    %616 = vmatpush1.msra.mxu0 0.0
    %617 = vmatprep.subr.mxu0 0.0
    %618 = vmatpush1.msra.mxu0 0.0
    %619 = vmatprep.subr.mxu0 0.0
    %620 = vmatpush1.msra.mxu0 0.0
    %621 = vmatprep.subr.mxu0 0.0
    %622 = vmatpush1.msra.mxu0 0.0
    %623 = vmatprep.subr.mxu0 0.0
    %624 = vmatpush1.msra.mxu0 0.0
    %625 = vmatprep.subr.mxu0 0.0
    %626 = vmatpush1.msra.mxu0 0.0
    %627 = vmatprep.subr.mxu0 0.0
    %628 = vmatpush1.msra.mxu0 0.0
    %629 = vmatprep.subr.mxu0 0.0
    %630 = vmatpush1.msra.mxu0 0.0
    %631 = vmatprep.subr.mxu0 0.0
    %632 = vmatpush1.msra.mxu0 0.0
    %633 = vmatprep.subr.mxu0 0.0
    %634 = vmatpush1.msra.mxu0 0.0
    %635 = vmatprep.subr.mxu0 0.0
    %636 = vmatpush1.msra.mxu0 0.0
    %637 = vmatprep.subr.mxu0 0.0
    %638 = vmatpush1.msra.mxu0 %v207
    %639 = vmatprep.subr.mxu0 0.0
    %640 = vmatpush1.msra.mxu0 %v202
    %641 = vmatprep.subr.mxu0 0.0
    %642 = vmatpush2.msra.mxu0 0.0
    %643 = vmatprep.subr.mxu0 0.0
    %644 = vmatpush2.msra.mxu0 0.0
    %645 = vmatprep.subr.mxu0 0.0
    %646 = vmatpush2.msra.mxu0 0.0
    %647 = vmatprep.subr.mxu0 0.0
    %648 = vmatpush2.msra.mxu0 0.0
    %649 = vmatprep.subr.mxu0 0.0
    %650 = vmatpush2.msra.mxu0 0.0
    %651 = vmatprep.subr.mxu0 0.0
    %652 = vmatpush2.msra.mxu0 0.0
    %653 = vmatprep.subr.mxu0 0.0
    %654 = vmatpush2.msra.mxu0 0.0
    %655 = vmatprep.subr.mxu0 0.0
    %656 = vmatpush2.msra.mxu0 0.0
    %657 = vmatprep.subr.mxu0 0.0
    %658 = vmatpush2.msra.mxu0 0.0
    %659 = vmatprep.subr.mxu0 0.0
    %660 = vmatpush2.msra.mxu0 0.0
    %661 = vmatprep.subr.mxu0 0.0
    %662 = vmatpush2.msra.mxu0 0.0
    %663 = vmatprep.subr.mxu0 0.0
    %664 = vmatpush2.msra.mxu0 0.0
    %665 = vmatprep.subr.mxu0 0.0
    %666 = vmatpush2.msra.mxu0 0.0
    %667 = vmatprep.subr.mxu0 0.0
    %668 = vmatpush2.msra.mxu0 0.0
    %669 = vmatprep.subr.mxu0 0.0
    %670 = vmatpush2.msra.mxu0 0.0
    %671 = vmatprep.subr.mxu0 0.0
    %672 = vmatpush2.msra.mxu0 0.0
    %673 = vmatprep.mubr.f32.mxu0 0.0
    %674 = vmatmul.mubr.f32.gmra.mxu0 %v604
    %v675 = vpop.f32.mrf.mxu0
    %v676 = vadd.f32 0.0, %v675
    %v677 = vpop.f32.mrf.mxu0
    %678 = vmatprep.mubr.f32.mxu0 0.0
    %679 = vmatmul.mubr.f32.gmra.mxu0 %v607
    %v680 = vpop.f32.mrf.mxu0
    %v681 = vadd.f32 0.0, %v680
    %v682 = vpop.f32.mrf.mxu0
    %683 = vdwg.mxu0
    %v684 = vld [vmem:[%s8] sm:$0x1]
    %v686 = vlaneseq
    %v687 = vshrl.u32 %v686, 7
    %v688 = vsub.s32 0, %v687
    %v689 = vrot.slane %v684, %v688
    %v691 = vadd.f32 %v595, %v689
    %v692 = vadd.f32 %v600, %v689
    %v693 = vadd.f32 %v676, %v689
    %v694 = vadd.f32 %v681, %v689
    %vm695 = vcmp.gt.f32.partialorder %v691, 0.0
    %vm696 = vcmp.gt.f32.partialorder %v692, 0.0
    %vm697 = vcmp.gt.f32.partialorder %v693, 0.0
    %vm698 = vcmp.gt.f32.partialorder %v694, 0.0
    %v699 = vmul.f32 %v691, 1.442695
    %v700 = vpow.pop %v699
    %v701 = vmul.f32 %v692, 1.442695
    %v702 = vpow.pop %v701
    %v703 = vmul.f32 %v693, 1.442695
    %v704 = vpow.pop %v703
    %v705 = vmul.f32 %v694, 1.442695
    %v706 = vpow.pop %v705
    %v707 = vsub.f32 %v700, 1.0
    %v708 = vsub.f32 %v702, 1.0
    %v709 = vsub.f32 %v704, 1.0
    %v710 = vsub.f32 %v706, 1.0
    %v711 = vsel %vm695, %v691, %v707
    %v712 = vsel %vm696, %v692, %v708
    %v713 = vsel %vm697, %v693, %v709
    %v714 = vsel %vm698, %v694, %v710
    %s715 = sld [smem:[#allocation3 + $0x4]]
    %v716 = vstv %s715
    %v717 = vmul.f32 %v716, %v92
    %v718 = vmul.f32 %v716, %v93
    %v719 = vmul.f32 %v716, %v94
    %v720 = vmul.f32 %v716, %v95
    %s721 = sld [smem:[#allocation3 + $0x5]]
    %v722 = vstv %s721
    %v723 = vmul.f32 %v722, %v97
    %v724 = vmul.f32 %v722, %v98
    %v725 = vmul.f32 %v722, %v99
    %v726 = vmul.f32 %v722, %v100
    %v727 = vadd.f32 %v717, %v723
    %v728 = vadd.f32 %v718, %v724
    %v729 = vadd.f32 %v719, %v725
    %v730 = vadd.f32 %v720, %v726
    %s731 = sld [smem:[#allocation3 + $0x6]]
    %v732 = vstv %s731
    %v733 = vmul.f32 %v732, %v102
    %v734 = vmul.f32 %v732, %v103
    %v735 = vmul.f32 %v732, %v104
    %v736 = vmul.f32 %v732, %v105
    %v737 = vadd.f32 %v727, %v733
    %v738 = vadd.f32 %v728, %v734
    %v739 = vadd.f32 %v729, %v735
    %v740 = vadd.f32 %v730, %v736
    %s741 = sld [smem:[#allocation3 + $0x7]]
    %v742 = vstv %s741
    %v743 = vmul.f32 %v742, %v107
    %v744 = vmul.f32 %v742, %v108
    %v745 = vmul.f32 %v742, %v109
    %v746 = vmul.f32 %v742, %v110
    %v747 = vadd.f32 %v737, %v743
    %v748 = vadd.f32 %v738, %v744
    %v749 = vadd.f32 %v739, %v745
    %v750 = vadd.f32 %v740, %v746
    %s751 = scalar_lea.vmem %s5, 1
    %v752 = vld [vmem:[%s751] sm:$0x1]
    %753 = vrot.lane.b32.xlu0 %v192, 120
    %v754 = vpop.permute.xlu0 %753
    %755 = vrot.lane.b32.xlu0 %v197, 120
    %v756 = vpop.permute.xlu0 %755
    %v758 = vsel %vm112, %v752, 0
    %v760 = vsel %vm112, %v754, 0
    %v762 = vsel %vm112, %v756, 0
    %764 = vmatprep.subr.mxu0 0.0
    %765 = vmatpush1.xpose.msra.mxu0 0.0
    %766 = vmatprep.subr.mxu0 0.0
    %767 = vmatpush1.xpose.msra.mxu0 0.0
    %768 = vmatprep.subr.mxu0 0.0
    %769 = vmatpush1.xpose.msra.mxu0 0.0
    %770 = vmatprep.subr.mxu0 0.0
    %771 = vmatpush1.xpose.msra.mxu0 0.0
    %772 = vmatprep.subr.mxu0 0.0
    %773 = vmatpush1.xpose.msra.mxu0 0.0
    %774 = vmatprep.subr.mxu0 0.0
    %775 = vmatpush1.xpose.msra.mxu0 0.0
    %776 = vmatprep.subr.mxu0 0.0
    %777 = vmatpush1.xpose.msra.mxu0 0.0
    %778 = vmatprep.subr.mxu0 0.0
    %779 = vmatpush1.xpose.msra.mxu0 0.0
    %780 = vmatprep.subr.mxu0 0.0
    %781 = vmatpush1.xpose.msra.mxu0 0.0
    %782 = vmatprep.subr.mxu0 0.0
    %783 = vmatpush1.xpose.msra.mxu0 0.0
    %784 = vmatprep.subr.mxu0 0.0
    %785 = vmatpush1.xpose.msra.mxu0 0.0
    %786 = vmatprep.subr.mxu0 0.0
    %787 = vmatpush1.xpose.msra.mxu0 0.0
    %788 = vmatprep.subr.mxu0 0.0
    %789 = vmatpush1.xpose.msra.mxu0 0.0
    %790 = vmatprep.subr.mxu0 0.0
    %791 = vmatpush1.xpose.msra.mxu0 0.0
    %792 = vmatprep.subr.mxu0 0.0
    %793 = vmatpush1.xpose.msra.mxu0 %v762
    %794 = vmatprep.subr.mxu0 0.0
    %795 = vmatpush1.xpose.msra.mxu0 %v760
    %796 = vmatprep.subr.mxu0 0.0
    %797 = vmatpush2.xpose.msra.mxu0 0.0
    %798 = vmatprep.subr.mxu0 0.0
    %799 = vmatpush2.xpose.msra.mxu0 0.0
    %800 = vmatprep.subr.mxu0 0.0
    %801 = vmatpush2.xpose.msra.mxu0 0.0
    %802 = vmatprep.subr.mxu0 0.0
    %803 = vmatpush2.xpose.msra.mxu0 0.0
    %804 = vmatprep.subr.mxu0 0.0
    %805 = vmatpush2.xpose.msra.mxu0 0.0
    %806 = vmatprep.subr.mxu0 0.0
    %807 = vmatpush2.xpose.msra.mxu0 0.0
    %808 = vmatprep.subr.mxu0 0.0
    %809 = vmatpush2.xpose.msra.mxu0 0.0
    %810 = vmatprep.subr.mxu0 0.0
    %811 = vmatpush2.xpose.msra.mxu0 0.0
    %812 = vmatprep.subr.mxu0 0.0
    %813 = vmatpush2.xpose.msra.mxu0 0.0
    %814 = vmatprep.subr.mxu0 0.0
    %815 = vmatpush2.xpose.msra.mxu0 0.0
    %816 = vmatprep.subr.mxu0 0.0
    %817 = vmatpush2.xpose.msra.mxu0 0.0
    %818 = vmatprep.subr.mxu0 0.0
    %819 = vmatpush2.xpose.msra.mxu0 0.0
    %820 = vmatprep.subr.mxu0 0.0
    %821 = vmatpush2.xpose.msra.mxu0 0.0
    %822 = vmatprep.subr.mxu0 0.0
    %823 = vmatpush2.xpose.msra.mxu0 0.0
    %824 = vmatprep.subr.mxu0 0.0
    %825 = vmatpush2.xpose.msra.mxu0 0.0
    %826 = vmatprep.subr.mxu0 0.0
    %827 = vmatpush2.xpose.msra.mxu0 0.0
    %828 = vmatprep.mubr.f32.mxu0 0.0
    %829 = vmatmul.mubr.f32.gmra.mxu0 %v758
    %v830 = vpop.f32.mrf.mxu0
    %v831 = vadd.f32 0.0, %v830
    %v832 = vpop.f32.mrf.mxu0
    %833 = vdwg.mxu0
    %834 = vrot.lane.b32.xlu0 %v202, 120
    %v835 = vpop.permute.xlu0 %834
    %836 = vrot.lane.b32.xlu0 %v207, 120
    %v837 = vpop.permute.xlu0 %836
    %v838 = vsel %vm112, %v835, 0
    %v840 = vsel %vm112, %v837, 0
    %842 = vmatprep.subr.mxu0 0.0
    %843 = vmatpush1.xpose.msra.mxu0 0.0
    %844 = vmatprep.subr.mxu0 0.0
    %845 = vmatpush1.xpose.msra.mxu0 0.0
    %846 = vmatprep.subr.mxu0 0.0
    %847 = vmatpush1.xpose.msra.mxu0 0.0
    %848 = vmatprep.subr.mxu0 0.0
    %849 = vmatpush1.xpose.msra.mxu0 0.0
    %850 = vmatprep.subr.mxu0 0.0
    %851 = vmatpush1.xpose.msra.mxu0 0.0
    %852 = vmatprep.subr.mxu0 0.0
    %853 = vmatpush1.xpose.msra.mxu0 0.0
    %854 = vmatprep.subr.mxu0 0.0
    %855 = vmatpush1.xpose.msra.mxu0 0.0
    %856 = vmatprep.subr.mxu0 0.0
    %857 = vmatpush1.xpose.msra.mxu0 0.0
    %858 = vmatprep.subr.mxu0 0.0
    %859 = vmatpush1.xpose.msra.mxu0 0.0
    %860 = vmatprep.subr.mxu0 0.0
    %861 = vmatpush1.xpose.msra.mxu0 0.0
    %862 = vmatprep.subr.mxu0 0.0
    %863 = vmatpush1.xpose.msra.mxu0 0.0
    %864 = vmatprep.subr.mxu0 0.0
    %865 = vmatpush1.xpose.msra.mxu0 0.0
    %866 = vmatprep.subr.mxu0 0.0
    %867 = vmatpush1.xpose.msra.mxu0 0.0
    %868 = vmatprep.subr.mxu0 0.0
    %869 = vmatpush1.xpose.msra.mxu0 0.0
    %870 = vmatprep.subr.mxu0 0.0
    %871 = vmatpush1.xpose.msra.mxu0 %v840
    %872 = vmatprep.subr.mxu0 0.0
    %873 = vmatpush1.xpose.msra.mxu0 %v838
    %874 = vmatprep.subr.mxu0 0.0
    %875 = vmatpush2.xpose.msra.mxu0 0.0
    %876 = vmatprep.subr.mxu0 0.0
    %877 = vmatpush2.xpose.msra.mxu0 0.0
    %878 = vmatprep.subr.mxu0 0.0
    %879 = vmatpush2.xpose.msra.mxu0 0.0
    %880 = vmatprep.subr.mxu0 0.0
    %881 = vmatpush2.xpose.msra.mxu0 0.0
    %882 = vmatprep.subr.mxu0 0.0
    %883 = vmatpush2.xpose.msra.mxu0 0.0
    %884 = vmatprep.subr.mxu0 0.0
    %885 = vmatpush2.xpose.msra.mxu0 0.0
    %886 = vmatprep.subr.mxu0 0.0
    %887 = vmatpush2.xpose.msra.mxu0 0.0
    %888 = vmatprep.subr.mxu0 0.0
    %889 = vmatpush2.xpose.msra.mxu0 0.0
    %890 = vmatprep.subr.mxu0 0.0
    %891 = vmatpush2.xpose.msra.mxu0 0.0
    %892 = vmatprep.subr.mxu0 0.0
    %893 = vmatpush2.xpose.msra.mxu0 0.0
    %894 = vmatprep.subr.mxu0 0.0
    %895 = vmatpush2.xpose.msra.mxu0 0.0
    %896 = vmatprep.subr.mxu0 0.0
    %897 = vmatpush2.xpose.msra.mxu0 0.0
    %898 = vmatprep.subr.mxu0 0.0
    %899 = vmatpush2.xpose.msra.mxu0 0.0
    %900 = vmatprep.subr.mxu0 0.0
    %901 = vmatpush2.xpose.msra.mxu0 0.0
    %902 = vmatprep.subr.mxu0 0.0
    %903 = vmatpush2.xpose.msra.mxu0 0.0
    %904 = vmatprep.subr.mxu0 0.0
    %905 = vmatpush2.xpose.msra.mxu0 0.0
    %906 = vmatprep.mubr.f32.mxu0 0.0
    %907 = vmatmul.mubr.f32.gmra.mxu0 %v758
    %v908 = vpop.f32.mrf.mxu0
    %v909 = vadd.f32 0.0, %v908
    %v910 = vpop.f32.mrf.mxu0
    %911 = vdwg.mxu0
    %v912 = vlaneseq
    %v913 = vshrl.u32 %v912, 7
    %v914 = vsub.s32 0, %v913
    %v915 = vrot.slane %v831, %v914
    %v916 = vlaneseq
    %v917 = vshrl.u32 %v916, 7
    %v918 = vsub.s32 0, %v917
    %v919 = vrot.slane %v909, %v918
    %s920 = scalar_lea.vmem %s6, 1
    %v921 = vld [vmem:[%s920] sm:$0x1]
    %v923 = vlaneseq
    %v924 = vshrl.u32 %v923, 7
    %v925 = vsub.s32 0, %v924
    %v926 = vrot.slane %v921, %v925
    %927 = vrot.lane.b32.xlu0 %v926, 8
    %v928 = vpop.permute.xlu0 %927
    %v930 = vmul.f32 %v192, %v928
    %v931 = vmul.f32 %v197, %v928
    %v932 = vmul.f32 %v202, %v928
    %v933 = vmul.f32 %v207, %v928
    %938 = vrot.lane.b32.xlu0 %v930, 120
    %v939 = vpop.permute.xlu0 %938
    %940 = vrot.lane.b32.xlu0 %v931, 120
    %v941 = vpop.permute.xlu0 %940
    %942 = vrot.lane.b32.xlu0 %v932, 120
    %v943 = vpop.permute.xlu0 %942
    %944 = vrot.lane.b32.xlu0 %v933, 120
    %v945 = vpop.permute.xlu0 %944
    %v950 = vsel %vm112, %v939, 0.0
    %951 = vadd.xlane.f32.xlu0 %v950
    %v952 = vpop.xlane.xlu0 %951
    %v953 = vsel %vm112, %v941, 0.0
    %954 = vadd.xlane.f32.xlu0 %v953
    %v955 = vpop.xlane.xlu0 %954
    %v956 = vsel %vm112, %v943, 0.0
    %957 = vadd.xlane.f32.xlu0 %v956
    %v958 = vpop.xlane.xlu0 %957
    %v959 = vsel %vm112, %v945, 0.0
    %960 = vadd.xlane.f32.xlu0 %v959
    %v961 = vpop.xlane.xlu0 %960
    %v962 = vadd.f32 %v952, %v915
    %v963 = vadd.f32 %v955, %v915
    %v964 = vadd.f32 %v958, %v919
    %v965 = vadd.f32 %v961, %v919
    %v966 = vadd.f32 %v962, %v747
    %v967 = vadd.f32 %v963, %v748
    %v968 = vadd.f32 %v964, %v749
    %v969 = vadd.f32 %v965, %v750
    %vm970 = vcmp.gt.f32.partialorder %v966, 0.0
    %vm971 = vcmp.gt.f32.partialorder %v967, 0.0
    %vm972 = vcmp.gt.f32.partialorder %v968, 0.0
    %vm973 = vcmp.gt.f32.partialorder %v969, 0.0
    %v974 = vmul.f32 %v966, 0.2
    %v975 = vmul.f32 %v967, 0.2
    %v976 = vmul.f32 %v968, 0.2
    %v977 = vmul.f32 %v969, 0.2
    %v978 = vsel %vm970, %v966, %v974
    %v979 = vsel %vm971, %v967, %v975
    %v980 = vsel %vm972, %v968, %v976
    %v981 = vsel %vm973, %v969, %v977
    %v982 = vsel %vm88, %v978, -1e+30
    %v983 = vsel %vm89, %v979, -1e+30
    %v984 = vsel %vm90, %v980, -1e+30
    %v985 = vsel %vm91, %v981, -1e+30
    %v986 = vsel %vm457, %v982, -inf
    %987 = vmax.xlane.f32.xlu0 %v986
    %v988 = vpop.xlane.xlu0 %987
    %v989 = vsel %vm457, %v983, -inf
    %990 = vmax.xlane.f32.xlu0 %v989
    %v991 = vpop.xlane.xlu0 %990
    %v992 = vsel %vm457, %v984, -inf
    %993 = vmax.xlane.f32.xlu0 %v992
    %v994 = vpop.xlane.xlu0 %993
    %v995 = vsel %vm457, %v985, -inf
    %996 = vmax.xlane.f32.xlu0 %v995
    %v997 = vpop.xlane.xlu0 %996
    %v998 = vsub.f32 %v982, %v988
    %v999 = vsub.f32 %v983, %v991
    %v1000 = vsub.f32 %v984, %v994
    %v1001 = vsub.f32 %v985, %v997
    %v1002 = vmul.f32 %v998, 1.442695
    %v1003 = vpow.pop %v1002
    %v1004 = vmul.f32 %v999, 1.442695
    %v1005 = vpow.pop %v1004
    %v1006 = vmul.f32 %v1000, 1.442695
    %v1007 = vpow.pop %v1006
    %v1008 = vmul.f32 %v1001, 1.442695
    %v1009 = vpow.pop %v1008
    %v1010 = vsel %vm88, %v1003, 0.0
    %v1011 = vsel %vm89, %v1005, 0.0
    %v1012 = vsel %vm90, %v1007, 0.0
    %v1013 = vsel %vm91, %v1009, 0.0
    %v1014 = vsel %vm457, %v1010, 0.0
    %1015 = vadd.xlane.f32.xlu0 %v1014
    %v1016 = vpop.xlane.xlu0 %1015
    %v1017 = vsel %vm457, %v1011, 0.0
    %1018 = vadd.xlane.f32.xlu0 %v1017
    %v1019 = vpop.xlane.xlu0 %1018
    %v1020 = vsel %vm457, %v1012, 0.0
    %1021 = vadd.xlane.f32.xlu0 %v1020
    %v1022 = vpop.xlane.xlu0 %1021
    %v1023 = vsel %vm457, %v1013, 0.0
    %1024 = vadd.xlane.f32.xlu0 %v1023
    %v1025 = vpop.xlane.xlu0 %1024
    %v1026 = vmax.f32 %v1016, 1e-20
    %v1027 = vmax.f32 %v1019, 1e-20
    %v1028 = vmax.f32 %v1022, 1e-20
    %v1029 = vmax.f32 %v1025, 1e-20
    %v1030 = vrcp.pop %v1026
    %v1031 = vrcp.pop %v1027
    %v1032 = vrcp.pop %v1028
    %v1033 = vrcp.pop %v1029
    %v1034 = vmul.f32 %v1026, %v1030
    %v1035 = vmul.f32 %v1027, %v1031
    %v1036 = vmul.f32 %v1028, %v1032
    %v1037 = vmul.f32 %v1029, %v1033
    %v1038 = vsub.f32 2.0, %v1034
    %v1039 = vsub.f32 2.0, %v1035
    %v1040 = vsub.f32 2.0, %v1036
    %v1041 = vsub.f32 2.0, %v1037
    %v1042 = vmul.f32 %v1030, %v1038
    %v1043 = vmul.f32 %v1031, %v1039
    %v1044 = vmul.f32 %v1032, %v1040
    %v1045 = vmul.f32 %v1033, %v1041
    %v1046 = vmul.f32 %v1010, %v1042
    %v1047 = vmul.f32 %v1011, %v1043
    %v1048 = vmul.f32 %v1012, %v1044
    %v1049 = vmul.f32 %v1013, %v1045
    %v1053 = vsel %vm457, %v1046, 0
    %v1056 = vsel %vm457, %v1047, 0
    %1058 = vmatprep.subr.mxu0 0.0
    %1059 = vmatpush1.msra.mxu0 0.0
    %1060 = vmatprep.subr.mxu0 0.0
    %1061 = vmatpush1.msra.mxu0 0.0
    %1062 = vmatprep.subr.mxu0 0.0
    %1063 = vmatpush1.msra.mxu0 0.0
    %1064 = vmatprep.subr.mxu0 0.0
    %1065 = vmatpush1.msra.mxu0 0.0
    %1066 = vmatprep.subr.mxu0 0.0
    %1067 = vmatpush1.msra.mxu0 0.0
    %1068 = vmatprep.subr.mxu0 0.0
    %1069 = vmatpush1.msra.mxu0 0.0
    %1070 = vmatprep.subr.mxu0 0.0
    %1071 = vmatpush1.msra.mxu0 0.0
    %1072 = vmatprep.subr.mxu0 0.0
    %1073 = vmatpush1.msra.mxu0 0.0
    %1074 = vmatprep.subr.mxu0 0.0
    %1075 = vmatpush1.msra.mxu0 0.0
    %1076 = vmatprep.subr.mxu0 0.0
    %1077 = vmatpush1.msra.mxu0 0.0
    %1078 = vmatprep.subr.mxu0 0.0
    %1079 = vmatpush1.msra.mxu0 0.0
    %1080 = vmatprep.subr.mxu0 0.0
    %1081 = vmatpush1.msra.mxu0 0.0
    %1082 = vmatprep.subr.mxu0 0.0
    %1083 = vmatpush1.msra.mxu0 0.0
    %1084 = vmatprep.subr.mxu0 0.0
    %1085 = vmatpush1.msra.mxu0 0.0
    %1086 = vmatprep.subr.mxu0 0.0
    %1087 = vmatpush1.msra.mxu0 %v756
    %1088 = vmatprep.subr.mxu0 0.0
    %1089 = vmatpush1.msra.mxu0 %v754
    %1090 = vmatprep.subr.mxu0 0.0
    %1091 = vmatpush2.msra.mxu0 0.0
    %1092 = vmatprep.subr.mxu0 0.0
    %1093 = vmatpush2.msra.mxu0 0.0
    %1094 = vmatprep.subr.mxu0 0.0
    %1095 = vmatpush2.msra.mxu0 0.0
    %1096 = vmatprep.subr.mxu0 0.0
    %1097 = vmatpush2.msra.mxu0 0.0
    %1098 = vmatprep.subr.mxu0 0.0
    %1099 = vmatpush2.msra.mxu0 0.0
    %1100 = vmatprep.subr.mxu0 0.0
    %1101 = vmatpush2.msra.mxu0 0.0
    %1102 = vmatprep.subr.mxu0 0.0
    %1103 = vmatpush2.msra.mxu0 0.0
    %1104 = vmatprep.subr.mxu0 0.0
    %1105 = vmatpush2.msra.mxu0 0.0
    %1106 = vmatprep.subr.mxu0 0.0
    %1107 = vmatpush2.msra.mxu0 0.0
    %1108 = vmatprep.subr.mxu0 0.0
    %1109 = vmatpush2.msra.mxu0 0.0
    %1110 = vmatprep.subr.mxu0 0.0
    %1111 = vmatpush2.msra.mxu0 0.0
    %1112 = vmatprep.subr.mxu0 0.0
    %1113 = vmatpush2.msra.mxu0 0.0
    %1114 = vmatprep.subr.mxu0 0.0
    %1115 = vmatpush2.msra.mxu0 0.0
    %1116 = vmatprep.subr.mxu0 0.0
    %1117 = vmatpush2.msra.mxu0 0.0
    %1118 = vmatprep.subr.mxu0 0.0
    %1119 = vmatpush2.msra.mxu0 0.0
    %1120 = vmatprep.subr.mxu0 0.0
    %1121 = vmatpush2.msra.mxu0 0.0
    %1122 = vmatprep.mubr.f32.mxu0 0.0
    %1123 = vmatmul.mubr.f32.gmra.mxu0 %v1053
    %v1124 = vpop.f32.mrf.mxu0
    %v1125 = vadd.f32 0.0, %v1124
    %v1126 = vpop.f32.mrf.mxu0
    %1127 = vmatprep.mubr.f32.mxu0 0.0
    %1128 = vmatmul.mubr.f32.gmra.mxu0 %v1056
    %v1129 = vpop.f32.mrf.mxu0
    %v1130 = vadd.f32 0.0, %v1129
    %v1131 = vpop.f32.mrf.mxu0
    %1132 = vdwg.mxu0
    %v1136 = vsel %vm457, %v1048, 0
    %v1139 = vsel %vm457, %v1049, 0
    %1141 = vmatprep.subr.mxu0 0.0
    %1142 = vmatpush1.msra.mxu0 0.0
    %1143 = vmatprep.subr.mxu0 0.0
    %1144 = vmatpush1.msra.mxu0 0.0
    %1145 = vmatprep.subr.mxu0 0.0
    %1146 = vmatpush1.msra.mxu0 0.0
    %1147 = vmatprep.subr.mxu0 0.0
    %1148 = vmatpush1.msra.mxu0 0.0
    %1149 = vmatprep.subr.mxu0 0.0
    %1150 = vmatpush1.msra.mxu0 0.0
    %1151 = vmatprep.subr.mxu0 0.0
    %1152 = vmatpush1.msra.mxu0 0.0
    %1153 = vmatprep.subr.mxu0 0.0
    %1154 = vmatpush1.msra.mxu0 0.0
    %1155 = vmatprep.subr.mxu0 0.0
    %1156 = vmatpush1.msra.mxu0 0.0
    %1157 = vmatprep.subr.mxu0 0.0
    %1158 = vmatpush1.msra.mxu0 0.0
    %1159 = vmatprep.subr.mxu0 0.0
    %1160 = vmatpush1.msra.mxu0 0.0
    %1161 = vmatprep.subr.mxu0 0.0
    %1162 = vmatpush1.msra.mxu0 0.0
    %1163 = vmatprep.subr.mxu0 0.0
    %1164 = vmatpush1.msra.mxu0 0.0
    %1165 = vmatprep.subr.mxu0 0.0
    %1166 = vmatpush1.msra.mxu0 0.0
    %1167 = vmatprep.subr.mxu0 0.0
    %1168 = vmatpush1.msra.mxu0 0.0
    %1169 = vmatprep.subr.mxu0 0.0
    %1170 = vmatpush1.msra.mxu0 %v837
    %1171 = vmatprep.subr.mxu0 0.0
    %1172 = vmatpush1.msra.mxu0 %v835
    %1173 = vmatprep.subr.mxu0 0.0
    %1174 = vmatpush2.msra.mxu0 0.0
    %1175 = vmatprep.subr.mxu0 0.0
    %1176 = vmatpush2.msra.mxu0 0.0
    %1177 = vmatprep.subr.mxu0 0.0
    %1178 = vmatpush2.msra.mxu0 0.0
    %1179 = vmatprep.subr.mxu0 0.0
    %1180 = vmatpush2.msra.mxu0 0.0
    %1181 = vmatprep.subr.mxu0 0.0
    %1182 = vmatpush2.msra.mxu0 0.0
    %1183 = vmatprep.subr.mxu0 0.0
    %1184 = vmatpush2.msra.mxu0 0.0
    %1185 = vmatprep.subr.mxu0 0.0
    %1186 = vmatpush2.msra.mxu0 0.0
    %1187 = vmatprep.subr.mxu0 0.0
    %1188 = vmatpush2.msra.mxu0 0.0
    %1189 = vmatprep.subr.mxu0 0.0
    %1190 = vmatpush2.msra.mxu0 0.0
    %1191 = vmatprep.subr.mxu0 0.0
    %1192 = vmatpush2.msra.mxu0 0.0
    %1193 = vmatprep.subr.mxu0 0.0
    %1194 = vmatpush2.msra.mxu0 0.0
    %1195 = vmatprep.subr.mxu0 0.0
    %1196 = vmatpush2.msra.mxu0 0.0
    %1197 = vmatprep.subr.mxu0 0.0
    %1198 = vmatpush2.msra.mxu0 0.0
    %1199 = vmatprep.subr.mxu0 0.0
    %1200 = vmatpush2.msra.mxu0 0.0
    %1201 = vmatprep.subr.mxu0 0.0
    %1202 = vmatpush2.msra.mxu0 0.0
    %1203 = vmatprep.subr.mxu0 0.0
    %1204 = vmatpush2.msra.mxu0 0.0
    %1205 = vmatprep.mubr.f32.mxu0 0.0
    %1206 = vmatmul.mubr.f32.gmra.mxu0 %v1136
    %v1207 = vpop.f32.mrf.mxu0
    %v1208 = vadd.f32 0.0, %v1207
    %v1209 = vpop.f32.mrf.mxu0
    %1210 = vmatprep.mubr.f32.mxu0 0.0
    %1211 = vmatmul.mubr.f32.gmra.mxu0 %v1139
    %v1212 = vpop.f32.mrf.mxu0
    %v1213 = vadd.f32 0.0, %v1212
    %v1214 = vpop.f32.mrf.mxu0
    %1215 = vdwg.mxu0
    %s1216 = scalar_lea.vmem %s8, 1
    %v1217 = vld [vmem:[%s1216] sm:$0x1]
    %v1219 = vlaneseq
    %v1220 = vshrl.u32 %v1219, 7
    %v1221 = vsub.s32 0, %v1220
    %v1222 = vrot.slane %v1217, %v1221
    %v1224 = vadd.f32 %v1125, %v1222
    %v1225 = vadd.f32 %v1130, %v1222
    %v1226 = vadd.f32 %v1208, %v1222
    %v1227 = vadd.f32 %v1213, %v1222
    %vm1228 = vcmp.gt.f32.partialorder %v1224, 0.0
    %vm1229 = vcmp.gt.f32.partialorder %v1225, 0.0
    %vm1230 = vcmp.gt.f32.partialorder %v1226, 0.0
    %vm1231 = vcmp.gt.f32.partialorder %v1227, 0.0
    %v1232 = vmul.f32 %v1224, 1.442695
    %v1233 = vpow.pop %v1232
    %v1234 = vmul.f32 %v1225, 1.442695
    %v1235 = vpow.pop %v1234
    %v1236 = vmul.f32 %v1226, 1.442695
    %v1237 = vpow.pop %v1236
    %v1238 = vmul.f32 %v1227, 1.442695
    %v1239 = vpow.pop %v1238
    %v1240 = vsub.f32 %v1233, 1.0
    %v1241 = vsub.f32 %v1235, 1.0
    %v1242 = vsub.f32 %v1237, 1.0
    %v1243 = vsub.f32 %v1239, 1.0
    %v1244 = vsel %vm1228, %v1224, %v1240
    %v1245 = vsel %vm1229, %v1225, %v1241
    %v1246 = vsel %vm1230, %v1226, %v1242
    %v1247 = vsel %vm1231, %v1227, %v1243
    %v1248 = vld [vmem:[%s9] sm:$0xff]
    %v1249 = vld [vmem:[%s9 + $0x8] sm:$0xff]
    %v1251 = vsel %vm112, %v1244, 0
    %v1254 = vsel %vm112, %v1245, 0
    %v1257 = vsel %vm112, %v1246, 0
    %v1260 = vsel %vm112, %v1247, 0
    %1262 = vmatprep.subr.mxu0 0.0
    %1263 = vmatpush1.msra.mxu0 0.0
    %1264 = vmatprep.subr.mxu0 0.0
    %1265 = vmatpush1.msra.mxu0 0.0
    %1266 = vmatprep.subr.mxu0 0.0
    %1267 = vmatpush1.msra.mxu0 0.0
    %1268 = vmatprep.subr.mxu0 0.0
    %1269 = vmatpush1.msra.mxu0 0.0
    %1270 = vmatprep.subr.mxu0 0.0
    %1271 = vmatpush1.msra.mxu0 0.0
    %1272 = vmatprep.subr.mxu0 0.0
    %1273 = vmatpush1.msra.mxu0 0.0
    %1274 = vmatprep.subr.mxu0 0.0
    %1275 = vmatpush1.msra.mxu0 0.0
    %1276 = vmatprep.subr.mxu0 0.0
    %1277 = vmatpush1.msra.mxu0 0.0
    %1278 = vmatprep.subr.mxu0 0.0
    %1279 = vmatpush1.msra.mxu0 0.0
    %1280 = vmatprep.subr.mxu0 0.0
    %1281 = vmatpush1.msra.mxu0 0.0
    %1282 = vmatprep.subr.mxu0 0.0
    %1283 = vmatpush1.msra.mxu0 0.0
    %1284 = vmatprep.subr.mxu0 0.0
    %1285 = vmatpush1.msra.mxu0 0.0
    %1286 = vmatprep.subr.mxu0 0.0
    %1287 = vmatpush1.msra.mxu0 0.0
    %1288 = vmatprep.subr.mxu0 0.0
    %1289 = vmatpush1.msra.mxu0 0.0
    %1290 = vmatprep.subr.mxu0 0.0
    %1291 = vmatpush1.msra.mxu0 0.0
    %1292 = vmatprep.subr.mxu0 0.0
    %1293 = vmatpush1.msra.mxu0 %v1249
    %1294 = vmatprep.subr.mxu0 0.0
    %1295 = vmatpush2.msra.mxu0 0.0
    %1296 = vmatprep.subr.mxu0 0.0
    %1297 = vmatpush2.msra.mxu0 0.0
    %1298 = vmatprep.subr.mxu0 0.0
    %1299 = vmatpush2.msra.mxu0 0.0
    %1300 = vmatprep.subr.mxu0 0.0
    %1301 = vmatpush2.msra.mxu0 0.0
    %1302 = vmatprep.subr.mxu0 0.0
    %1303 = vmatpush2.msra.mxu0 0.0
    %1304 = vmatprep.subr.mxu0 0.0
    %1305 = vmatpush2.msra.mxu0 0.0
    %1306 = vmatprep.subr.mxu0 0.0
    %1307 = vmatpush2.msra.mxu0 0.0
    %1308 = vmatprep.subr.mxu0 0.0
    %1309 = vmatpush2.msra.mxu0 0.0
    %1310 = vmatprep.subr.mxu0 0.0
    %1311 = vmatpush2.msra.mxu0 0.0
    %1312 = vmatprep.subr.mxu0 0.0
    %1313 = vmatpush2.msra.mxu0 0.0
    %1314 = vmatprep.subr.mxu0 0.0
    %1315 = vmatpush2.msra.mxu0 0.0
    %1316 = vmatprep.subr.mxu0 0.0
    %1317 = vmatpush2.msra.mxu0 0.0
    %1318 = vmatprep.subr.mxu0 0.0
    %1319 = vmatpush2.msra.mxu0 0.0
    %1320 = vmatprep.subr.mxu0 0.0
    %1321 = vmatpush2.msra.mxu0 0.0
    %1322 = vmatprep.subr.mxu0 0.0
    %1323 = vmatpush2.msra.mxu0 0.0
    %1324 = vmatprep.subr.mxu0 0.0
    %1325 = vmatpush2.msra.mxu0 0.0
    %1326 = vmatprep.mubr.f32.mxu0 0.0
    %1327 = vmatmul.mubr.f32.gmra.mxu0 %v1251
    %v1328 = vpop.f32.mrf.mxu0
    %v1329 = vadd.f32 0.0, %v1328
    %v1330 = vpop.f32.mrf.mxu0
    %1331 = vmatprep.mubr.f32.mxu0 0.0
    %1332 = vmatmul.mubr.f32.gmra.mxu0 %v1254
    %v1333 = vpop.f32.mrf.mxu0
    %v1334 = vadd.f32 0.0, %v1333
    %v1335 = vpop.f32.mrf.mxu0
    %1336 = vmatprep.mubr.f32.mxu0 0.0
    %1337 = vmatmul.mubr.f32.gmra.mxu0 %v1257
    %v1338 = vpop.f32.mrf.mxu0
    %v1339 = vadd.f32 0.0, %v1338
    %v1340 = vpop.f32.mrf.mxu0
    %1341 = vmatprep.mubr.f32.mxu0 0.0
    %1342 = vmatmul.mubr.f32.gmra.mxu0 %v1260
    %v1343 = vpop.f32.mrf.mxu0
    %v1344 = vadd.f32 0.0, %v1343
    %v1345 = vpop.f32.mrf.mxu0
    %1346 = vdwg.mxu0
    %v1348 = vsel %vm112, %v711, 0
    %v1351 = vsel %vm112, %v712, 0
    %v1354 = vsel %vm112, %v713, 0
    %v1357 = vsel %vm112, %v714, 0
    %1359 = vmatprep.subr.mxu0 0.0
    %1360 = vmatpush1.msra.mxu0 0.0
    %1361 = vmatprep.subr.mxu0 0.0
    %1362 = vmatpush1.msra.mxu0 0.0
    %1363 = vmatprep.subr.mxu0 0.0
    %1364 = vmatpush1.msra.mxu0 0.0
    %1365 = vmatprep.subr.mxu0 0.0
    %1366 = vmatpush1.msra.mxu0 0.0
    %1367 = vmatprep.subr.mxu0 0.0
    %1368 = vmatpush1.msra.mxu0 0.0
    %1369 = vmatprep.subr.mxu0 0.0
    %1370 = vmatpush1.msra.mxu0 0.0
    %1371 = vmatprep.subr.mxu0 0.0
    %1372 = vmatpush1.msra.mxu0 0.0
    %1373 = vmatprep.subr.mxu0 0.0
    %1374 = vmatpush1.msra.mxu0 0.0
    %1375 = vmatprep.subr.mxu0 0.0
    %1376 = vmatpush1.msra.mxu0 0.0
    %1377 = vmatprep.subr.mxu0 0.0
    %1378 = vmatpush1.msra.mxu0 0.0
    %1379 = vmatprep.subr.mxu0 0.0
    %1380 = vmatpush1.msra.mxu0 0.0
    %1381 = vmatprep.subr.mxu0 0.0
    %1382 = vmatpush1.msra.mxu0 0.0
    %1383 = vmatprep.subr.mxu0 0.0
    %1384 = vmatpush1.msra.mxu0 0.0
    %1385 = vmatprep.subr.mxu0 0.0
    %1386 = vmatpush1.msra.mxu0 0.0
    %1387 = vmatprep.subr.mxu0 0.0
    %1388 = vmatpush1.msra.mxu0 0.0
    %1389 = vmatprep.subr.mxu0 0.0
    %1390 = vmatpush1.msra.mxu0 %v1248
    %1391 = vmatprep.subr.mxu0 0.0
    %1392 = vmatpush2.msra.mxu0 0.0
    %1393 = vmatprep.subr.mxu0 0.0
    %1394 = vmatpush2.msra.mxu0 0.0
    %1395 = vmatprep.subr.mxu0 0.0
    %1396 = vmatpush2.msra.mxu0 0.0
    %1397 = vmatprep.subr.mxu0 0.0
    %1398 = vmatpush2.msra.mxu0 0.0
    %1399 = vmatprep.subr.mxu0 0.0
    %1400 = vmatpush2.msra.mxu0 0.0
    %1401 = vmatprep.subr.mxu0 0.0
    %1402 = vmatpush2.msra.mxu0 0.0
    %1403 = vmatprep.subr.mxu0 0.0
    %1404 = vmatpush2.msra.mxu0 0.0
    %1405 = vmatprep.subr.mxu0 0.0
    %1406 = vmatpush2.msra.mxu0 0.0
    %1407 = vmatprep.subr.mxu0 0.0
    %1408 = vmatpush2.msra.mxu0 0.0
    %1409 = vmatprep.subr.mxu0 0.0
    %1410 = vmatpush2.msra.mxu0 0.0
    %1411 = vmatprep.subr.mxu0 0.0
    %1412 = vmatpush2.msra.mxu0 0.0
    %1413 = vmatprep.subr.mxu0 0.0
    %1414 = vmatpush2.msra.mxu0 0.0
    %1415 = vmatprep.subr.mxu0 0.0
    %1416 = vmatpush2.msra.mxu0 0.0
    %1417 = vmatprep.subr.mxu0 0.0
    %1418 = vmatpush2.msra.mxu0 0.0
    %1419 = vmatprep.subr.mxu0 0.0
    %1420 = vmatpush2.msra.mxu0 0.0
    %1421 = vmatprep.subr.mxu0 0.0
    %1422 = vmatpush2.msra.mxu0 0.0
    %1423 = vmatprep.mubr.f32.mxu0 0.0
    %1424 = vmatmul.mubr.f32.gmra.mxu0 %v1348
    %v1425 = vpop.f32.mrf.mxu0
    %v1426 = vadd.f32 %v1329, %v1425
    %v1427 = vpop.f32.mrf.mxu0
    %1428 = vmatprep.mubr.f32.mxu0 0.0
    %1429 = vmatmul.mubr.f32.gmra.mxu0 %v1351
    %v1430 = vpop.f32.mrf.mxu0
    %v1431 = vadd.f32 %v1334, %v1430
    %v1432 = vpop.f32.mrf.mxu0
    %1433 = vmatprep.mubr.f32.mxu0 0.0
    %1434 = vmatmul.mubr.f32.gmra.mxu0 %v1354
    %v1435 = vpop.f32.mrf.mxu0
    %v1436 = vadd.f32 %v1339, %v1435
    %v1437 = vpop.f32.mrf.mxu0
    %1438 = vmatprep.mubr.f32.mxu0 0.0
    %1439 = vmatmul.mubr.f32.gmra.mxu0 %v1357
    %v1440 = vpop.f32.mrf.mxu0
    %v1441 = vadd.f32 %v1344, %v1440
    %v1442 = vpop.f32.mrf.mxu0
    %1443 = vdwg.mxu0
    %s1444 = sld [smem:[#allocation6]]
    %v1445 = vstv %s1444
    %v1446 = vmul.f32 %v1445, %v92
    %v1447 = vmul.f32 %v1445, %v93
    %v1448 = vmul.f32 %v1445, %v94
    %v1449 = vmul.f32 %v1445, %v95
    %s1450 = sld [smem:[#allocation6 + $0x1]]
    %v1451 = vstv %s1450
    %v1452 = vmul.f32 %v1451, %v97
    %v1453 = vmul.f32 %v1451, %v98
    %v1454 = vmul.f32 %v1451, %v99
    %v1455 = vmul.f32 %v1451, %v100
    %v1456 = vadd.f32 %v1446, %v1452
    %v1457 = vadd.f32 %v1447, %v1453
    %v1458 = vadd.f32 %v1448, %v1454
    %v1459 = vadd.f32 %v1449, %v1455
    %s1460 = sld [smem:[#allocation6 + $0x2]]
    %v1461 = vstv %s1460
    %v1462 = vmul.f32 %v1461, %v102
    %v1463 = vmul.f32 %v1461, %v103
    %v1464 = vmul.f32 %v1461, %v104
    %v1465 = vmul.f32 %v1461, %v105
    %v1466 = vadd.f32 %v1456, %v1462
    %v1467 = vadd.f32 %v1457, %v1463
    %v1468 = vadd.f32 %v1458, %v1464
    %v1469 = vadd.f32 %v1459, %v1465
    %s1470 = sld [smem:[#allocation6 + $0x3]]
    %v1471 = vstv %s1470
    %v1472 = vmul.f32 %v1471, %v107
    %v1473 = vmul.f32 %v1471, %v108
    %v1474 = vmul.f32 %v1471, %v109
    %v1475 = vmul.f32 %v1471, %v110
    %v1476 = vadd.f32 %v1466, %v1472
    %v1477 = vadd.f32 %v1467, %v1473
    %v1478 = vadd.f32 %v1468, %v1474
    %v1479 = vadd.f32 %v1469, %v1475
    %v1480 = vld [vmem:[%s10] sm:$0x1]
    %v1482 = vsel %vm457, %v1480, 0
    %v1485 = vsel %vm457, %v1426, 0
    %v1488 = vsel %vm457, %v1431, 0
    %1490 = vmatprep.subr.mxu0 0.0
    %1491 = vmatpush1.xpose.msra.mxu0 0.0
    %1492 = vmatprep.subr.mxu0 0.0
    %1493 = vmatpush1.xpose.msra.mxu0 0.0
    %1494 = vmatprep.subr.mxu0 0.0
    %1495 = vmatpush1.xpose.msra.mxu0 0.0
    %1496 = vmatprep.subr.mxu0 0.0
    %1497 = vmatpush1.xpose.msra.mxu0 0.0
    %1498 = vmatprep.subr.mxu0 0.0
    %1499 = vmatpush1.xpose.msra.mxu0 0.0
    %1500 = vmatprep.subr.mxu0 0.0
    %1501 = vmatpush1.xpose.msra.mxu0 0.0
    %1502 = vmatprep.subr.mxu0 0.0
    %1503 = vmatpush1.xpose.msra.mxu0 0.0
    %1504 = vmatprep.subr.mxu0 0.0
    %1505 = vmatpush1.xpose.msra.mxu0 0.0
    %1506 = vmatprep.subr.mxu0 0.0
    %1507 = vmatpush1.xpose.msra.mxu0 0.0
    %1508 = vmatprep.subr.mxu0 0.0
    %1509 = vmatpush1.xpose.msra.mxu0 0.0
    %1510 = vmatprep.subr.mxu0 0.0
    %1511 = vmatpush1.xpose.msra.mxu0 0.0
    %1512 = vmatprep.subr.mxu0 0.0
    %1513 = vmatpush1.xpose.msra.mxu0 0.0
    %1514 = vmatprep.subr.mxu0 0.0
    %1515 = vmatpush1.xpose.msra.mxu0 0.0
    %1516 = vmatprep.subr.mxu0 0.0
    %1517 = vmatpush1.xpose.msra.mxu0 0.0
    %1518 = vmatprep.subr.mxu0 0.0
    %1519 = vmatpush1.xpose.msra.mxu0 %v1488
    %1520 = vmatprep.subr.mxu0 0.0
    %1521 = vmatpush1.xpose.msra.mxu0 %v1485
    %1522 = vmatprep.subr.mxu0 0.0
    %1523 = vmatpush2.xpose.msra.mxu0 0.0
    %1524 = vmatprep.subr.mxu0 0.0
    %1525 = vmatpush2.xpose.msra.mxu0 0.0
    %1526 = vmatprep.subr.mxu0 0.0
    %1527 = vmatpush2.xpose.msra.mxu0 0.0
    %1528 = vmatprep.subr.mxu0 0.0
    %1529 = vmatpush2.xpose.msra.mxu0 0.0
    %1530 = vmatprep.subr.mxu0 0.0
    %1531 = vmatpush2.xpose.msra.mxu0 0.0
    %1532 = vmatprep.subr.mxu0 0.0
    %1533 = vmatpush2.xpose.msra.mxu0 0.0
    %1534 = vmatprep.subr.mxu0 0.0
    %1535 = vmatpush2.xpose.msra.mxu0 0.0
    %1536 = vmatprep.subr.mxu0 0.0
    %1537 = vmatpush2.xpose.msra.mxu0 0.0
    %1538 = vmatprep.subr.mxu0 0.0
    %1539 = vmatpush2.xpose.msra.mxu0 0.0
    %1540 = vmatprep.subr.mxu0 0.0
    %1541 = vmatpush2.xpose.msra.mxu0 0.0
    %1542 = vmatprep.subr.mxu0 0.0
    %1543 = vmatpush2.xpose.msra.mxu0 0.0
    %1544 = vmatprep.subr.mxu0 0.0
    %1545 = vmatpush2.xpose.msra.mxu0 0.0
    %1546 = vmatprep.subr.mxu0 0.0
    %1547 = vmatpush2.xpose.msra.mxu0 0.0
    %1548 = vmatprep.subr.mxu0 0.0
    %1549 = vmatpush2.xpose.msra.mxu0 0.0
    %1550 = vmatprep.subr.mxu0 0.0
    %1551 = vmatpush2.xpose.msra.mxu0 0.0
    %1552 = vmatprep.subr.mxu0 0.0
    %1553 = vmatpush2.xpose.msra.mxu0 0.0
    %1554 = vmatprep.mubr.f32.mxu0 0.0
    %1555 = vmatmul.mubr.f32.gmra.mxu0 %v1482
    %v1556 = vpop.f32.mrf.mxu0
    %v1557 = vadd.f32 0.0, %v1556
    %v1558 = vpop.f32.mrf.mxu0
    %1559 = vdwg.mxu0
    %v1561 = vsel %vm457, %v1436, 0
    %v1564 = vsel %vm457, %v1441, 0
    %1566 = vmatprep.subr.mxu0 0.0
    %1567 = vmatpush1.xpose.msra.mxu0 0.0
    %1568 = vmatprep.subr.mxu0 0.0
    %1569 = vmatpush1.xpose.msra.mxu0 0.0
    %1570 = vmatprep.subr.mxu0 0.0
    %1571 = vmatpush1.xpose.msra.mxu0 0.0
    %1572 = vmatprep.subr.mxu0 0.0
    %1573 = vmatpush1.xpose.msra.mxu0 0.0
    %1574 = vmatprep.subr.mxu0 0.0
    %1575 = vmatpush1.xpose.msra.mxu0 0.0
    %1576 = vmatprep.subr.mxu0 0.0
    %1577 = vmatpush1.xpose.msra.mxu0 0.0
    %1578 = vmatprep.subr.mxu0 0.0
    %1579 = vmatpush1.xpose.msra.mxu0 0.0
    %1580 = vmatprep.subr.mxu0 0.0
    %1581 = vmatpush1.xpose.msra.mxu0 0.0
    %1582 = vmatprep.subr.mxu0 0.0
    %1583 = vmatpush1.xpose.msra.mxu0 0.0
    %1584 = vmatprep.subr.mxu0 0.0
    %1585 = vmatpush1.xpose.msra.mxu0 0.0
    %1586 = vmatprep.subr.mxu0 0.0
    %1587 = vmatpush1.xpose.msra.mxu0 0.0
    %1588 = vmatprep.subr.mxu0 0.0
    %1589 = vmatpush1.xpose.msra.mxu0 0.0
    %1590 = vmatprep.subr.mxu0 0.0
    %1591 = vmatpush1.xpose.msra.mxu0 0.0
    %1592 = vmatprep.subr.mxu0 0.0
    %1593 = vmatpush1.xpose.msra.mxu0 0.0
    %1594 = vmatprep.subr.mxu0 0.0
    %1595 = vmatpush1.xpose.msra.mxu0 %v1564
    %1596 = vmatprep.subr.mxu0 0.0
    %1597 = vmatpush1.xpose.msra.mxu0 %v1561
    %1598 = vmatprep.subr.mxu0 0.0
    %1599 = vmatpush2.xpose.msra.mxu0 0.0
    %1600 = vmatprep.subr.mxu0 0.0
    %1601 = vmatpush2.xpose.msra.mxu0 0.0
    %1602 = vmatprep.subr.mxu0 0.0
    %1603 = vmatpush2.xpose.msra.mxu0 0.0
    %1604 = vmatprep.subr.mxu0 0.0
    %1605 = vmatpush2.xpose.msra.mxu0 0.0
    %1606 = vmatprep.subr.mxu0 0.0
    %1607 = vmatpush2.xpose.msra.mxu0 0.0
    %1608 = vmatprep.subr.mxu0 0.0
    %1609 = vmatpush2.xpose.msra.mxu0 0.0
    %1610 = vmatprep.subr.mxu0 0.0
    %1611 = vmatpush2.xpose.msra.mxu0 0.0
    %1612 = vmatprep.subr.mxu0 0.0
    %1613 = vmatpush2.xpose.msra.mxu0 0.0
    %1614 = vmatprep.subr.mxu0 0.0
    %1615 = vmatpush2.xpose.msra.mxu0 0.0
    %1616 = vmatprep.subr.mxu0 0.0
    %1617 = vmatpush2.xpose.msra.mxu0 0.0
    %1618 = vmatprep.subr.mxu0 0.0
    %1619 = vmatpush2.xpose.msra.mxu0 0.0
    %1620 = vmatprep.subr.mxu0 0.0
    %1621 = vmatpush2.xpose.msra.mxu0 0.0
    %1622 = vmatprep.subr.mxu0 0.0
    %1623 = vmatpush2.xpose.msra.mxu0 0.0
    %1624 = vmatprep.subr.mxu0 0.0
    %1625 = vmatpush2.xpose.msra.mxu0 0.0
    %1626 = vmatprep.subr.mxu0 0.0
    %1627 = vmatpush2.xpose.msra.mxu0 0.0
    %1628 = vmatprep.subr.mxu0 0.0
    %1629 = vmatpush2.xpose.msra.mxu0 0.0
    %1630 = vmatprep.mubr.f32.mxu0 0.0
    %1631 = vmatmul.mubr.f32.gmra.mxu0 %v1482
    %v1632 = vpop.f32.mrf.mxu0
    %v1633 = vadd.f32 0.0, %v1632
    %v1634 = vpop.f32.mrf.mxu0
    %1635 = vdwg.mxu0
    %v1636 = vlaneseq
    %v1637 = vshrl.u32 %v1636, 7
    %v1638 = vsub.s32 0, %v1637
    %v1639 = vrot.slane %v1557, %v1638
    %v1640 = vlaneseq
    %v1641 = vshrl.u32 %v1640, 7
    %v1642 = vsub.s32 0, %v1641
    %v1643 = vrot.slane %v1633, %v1642
    %v1644 = vld [vmem:[%s11] sm:$0x1]
    %v1646 = vlaneseq
    %v1647 = vshrl.u32 %v1646, 7
    %v1648 = vsub.s32 0, %v1647
    %v1649 = vrot.slane %v1644, %v1648
    %v1651 = vmul.f32 %v1426, %v1649
    %v1652 = vmul.f32 %v1431, %v1649
    %v1653 = vmul.f32 %v1436, %v1649
    %v1654 = vmul.f32 %v1441, %v1649
    %v1655 = vsel %vm457, %v1651, 0.0
    %1656 = vadd.xlane.f32.xlu0 %v1655
    %v1657 = vpop.xlane.xlu0 %1656
    %v1658 = vsel %vm457, %v1652, 0.0
    %1659 = vadd.xlane.f32.xlu0 %v1658
    %v1660 = vpop.xlane.xlu0 %1659
    %v1661 = vsel %vm457, %v1653, 0.0
    %1662 = vadd.xlane.f32.xlu0 %v1661
    %v1663 = vpop.xlane.xlu0 %1662
    %v1664 = vsel %vm457, %v1654, 0.0
    %1665 = vadd.xlane.f32.xlu0 %v1664
    %v1666 = vpop.xlane.xlu0 %1665
    %v1667 = vadd.f32 %v1657, %v1639
    %v1668 = vadd.f32 %v1660, %v1639
    %v1669 = vadd.f32 %v1663, %v1643
    %v1670 = vadd.f32 %v1666, %v1643
    %v1671 = vadd.f32 %v1667, %v1476
    %v1672 = vadd.f32 %v1668, %v1477
    %v1673 = vadd.f32 %v1669, %v1478
    %v1674 = vadd.f32 %v1670, %v1479
    %vm1675 = vcmp.gt.f32.partialorder %v1671, 0.0
    %vm1676 = vcmp.gt.f32.partialorder %v1672, 0.0
    %vm1677 = vcmp.gt.f32.partialorder %v1673, 0.0
    %vm1678 = vcmp.gt.f32.partialorder %v1674, 0.0
    %v1679 = vmul.f32 %v1671, 0.2
    %v1680 = vmul.f32 %v1672, 0.2
    %v1681 = vmul.f32 %v1673, 0.2
    %v1682 = vmul.f32 %v1674, 0.2
    %v1683 = vsel %vm1675, %v1671, %v1679
    %v1684 = vsel %vm1676, %v1672, %v1680
    %v1685 = vsel %vm1677, %v1673, %v1681
    %v1686 = vsel %vm1678, %v1674, %v1682
    %v1687 = vsel %vm88, %v1683, -1e+30
    %v1688 = vsel %vm89, %v1684, -1e+30
    %v1689 = vsel %vm90, %v1685, -1e+30
    %v1690 = vsel %vm91, %v1686, -1e+30
    %v1691 = vsel %vm457, %v1687, -inf
    %1692 = vmax.xlane.f32.xlu0 %v1691
    %v1693 = vpop.xlane.xlu0 %1692
    %v1694 = vsel %vm457, %v1688, -inf
    %1695 = vmax.xlane.f32.xlu0 %v1694
    %v1696 = vpop.xlane.xlu0 %1695
    %v1697 = vsel %vm457, %v1689, -inf
    %1698 = vmax.xlane.f32.xlu0 %v1697
    %v1699 = vpop.xlane.xlu0 %1698
    %v1700 = vsel %vm457, %v1690, -inf
    %1701 = vmax.xlane.f32.xlu0 %v1700
    %v1702 = vpop.xlane.xlu0 %1701
    %v1703 = vsub.f32 %v1687, %v1693
    %v1704 = vsub.f32 %v1688, %v1696
    %v1705 = vsub.f32 %v1689, %v1699
    %v1706 = vsub.f32 %v1690, %v1702
    %v1707 = vmul.f32 %v1703, 1.442695
    %v1708 = vpow.pop %v1707
    %v1709 = vmul.f32 %v1704, 1.442695
    %v1710 = vpow.pop %v1709
    %v1711 = vmul.f32 %v1705, 1.442695
    %v1712 = vpow.pop %v1711
    %v1713 = vmul.f32 %v1706, 1.442695
    %v1714 = vpow.pop %v1713
    %v1715 = vsel %vm88, %v1708, 0.0
    %v1716 = vsel %vm89, %v1710, 0.0
    %v1717 = vsel %vm90, %v1712, 0.0
    %v1718 = vsel %vm91, %v1714, 0.0
    %v1719 = vsel %vm457, %v1715, 0.0
    %1720 = vadd.xlane.f32.xlu0 %v1719
    %v1721 = vpop.xlane.xlu0 %1720
    %v1722 = vsel %vm457, %v1716, 0.0
    %1723 = vadd.xlane.f32.xlu0 %v1722
    %v1724 = vpop.xlane.xlu0 %1723
    %v1725 = vsel %vm457, %v1717, 0.0
    %1726 = vadd.xlane.f32.xlu0 %v1725
    %v1727 = vpop.xlane.xlu0 %1726
    %v1728 = vsel %vm457, %v1718, 0.0
    %1729 = vadd.xlane.f32.xlu0 %v1728
    %v1730 = vpop.xlane.xlu0 %1729
    %v1731 = vmax.f32 %v1721, 1e-20
    %v1732 = vmax.f32 %v1724, 1e-20
    %v1733 = vmax.f32 %v1727, 1e-20
    %v1734 = vmax.f32 %v1730, 1e-20
    %v1735 = vrcp.pop %v1731
    %v1736 = vrcp.pop %v1732
    %v1737 = vrcp.pop %v1733
    %v1738 = vrcp.pop %v1734
    %v1739 = vmul.f32 %v1731, %v1735
    %v1740 = vmul.f32 %v1732, %v1736
    %v1741 = vmul.f32 %v1733, %v1737
    %v1742 = vmul.f32 %v1734, %v1738
    %v1743 = vsub.f32 2.0, %v1739
    %v1744 = vsub.f32 2.0, %v1740
    %v1745 = vsub.f32 2.0, %v1741
    %v1746 = vsub.f32 2.0, %v1742
    %v1747 = vmul.f32 %v1735, %v1743
    %v1748 = vmul.f32 %v1736, %v1744
    %v1749 = vmul.f32 %v1737, %v1745
    %v1750 = vmul.f32 %v1738, %v1746
    %v1751 = vmul.f32 %v1715, %v1747
    %v1752 = vmul.f32 %v1716, %v1748
    %v1753 = vmul.f32 %v1717, %v1749
    %v1754 = vmul.f32 %v1718, %v1750
    %v1756 = vsel %vm457, %v1751, 0
    %v1759 = vsel %vm457, %v1752, 0
    %1761 = vmatprep.subr.mxu0 0.0
    %1762 = vmatpush1.msra.mxu0 0.0
    %1763 = vmatprep.subr.mxu0 0.0
    %1764 = vmatpush1.msra.mxu0 0.0
    %1765 = vmatprep.subr.mxu0 0.0
    %1766 = vmatpush1.msra.mxu0 0.0
    %1767 = vmatprep.subr.mxu0 0.0
    %1768 = vmatpush1.msra.mxu0 0.0
    %1769 = vmatprep.subr.mxu0 0.0
    %1770 = vmatpush1.msra.mxu0 0.0
    %1771 = vmatprep.subr.mxu0 0.0
    %1772 = vmatpush1.msra.mxu0 0.0
    %1773 = vmatprep.subr.mxu0 0.0
    %1774 = vmatpush1.msra.mxu0 0.0
    %1775 = vmatprep.subr.mxu0 0.0
    %1776 = vmatpush1.msra.mxu0 0.0
    %1777 = vmatprep.subr.mxu0 0.0
    %1778 = vmatpush1.msra.mxu0 0.0
    %1779 = vmatprep.subr.mxu0 0.0
    %1780 = vmatpush1.msra.mxu0 0.0
    %1781 = vmatprep.subr.mxu0 0.0
    %1782 = vmatpush1.msra.mxu0 0.0
    %1783 = vmatprep.subr.mxu0 0.0
    %1784 = vmatpush1.msra.mxu0 0.0
    %1785 = vmatprep.subr.mxu0 0.0
    %1786 = vmatpush1.msra.mxu0 0.0
    %1787 = vmatprep.subr.mxu0 0.0
    %1788 = vmatpush1.msra.mxu0 0.0
    %1789 = vmatprep.subr.mxu0 0.0
    %1790 = vmatpush1.msra.mxu0 %v1431
    %1791 = vmatprep.subr.mxu0 0.0
    %1792 = vmatpush1.msra.mxu0 %v1426
    %1793 = vmatprep.subr.mxu0 0.0
    %1794 = vmatpush2.msra.mxu0 0.0
    %1795 = vmatprep.subr.mxu0 0.0
    %1796 = vmatpush2.msra.mxu0 0.0
    %1797 = vmatprep.subr.mxu0 0.0
    %1798 = vmatpush2.msra.mxu0 0.0
    %1799 = vmatprep.subr.mxu0 0.0
    %1800 = vmatpush2.msra.mxu0 0.0
    %1801 = vmatprep.subr.mxu0 0.0
    %1802 = vmatpush2.msra.mxu0 0.0
    %1803 = vmatprep.subr.mxu0 0.0
    %1804 = vmatpush2.msra.mxu0 0.0
    %1805 = vmatprep.subr.mxu0 0.0
    %1806 = vmatpush2.msra.mxu0 0.0
    %1807 = vmatprep.subr.mxu0 0.0
    %1808 = vmatpush2.msra.mxu0 0.0
    %1809 = vmatprep.subr.mxu0 0.0
    %1810 = vmatpush2.msra.mxu0 0.0
    %1811 = vmatprep.subr.mxu0 0.0
    %1812 = vmatpush2.msra.mxu0 0.0
    %1813 = vmatprep.subr.mxu0 0.0
    %1814 = vmatpush2.msra.mxu0 0.0
    %1815 = vmatprep.subr.mxu0 0.0
    %1816 = vmatpush2.msra.mxu0 0.0
    %1817 = vmatprep.subr.mxu0 0.0
    %1818 = vmatpush2.msra.mxu0 0.0
    %1819 = vmatprep.subr.mxu0 0.0
    %1820 = vmatpush2.msra.mxu0 0.0
    %1821 = vmatprep.subr.mxu0 0.0
    %1822 = vmatpush2.msra.mxu0 0.0
    %1823 = vmatprep.subr.mxu0 0.0
    %1824 = vmatpush2.msra.mxu0 0.0
    %1825 = vmatprep.mubr.f32.mxu0 0.0
    %1826 = vmatmul.mubr.f32.gmra.mxu0 %v1756
    %v1827 = vpop.f32.mrf.mxu0
    %v1828 = vadd.f32 0.0, %v1827
    %v1829 = vpop.f32.mrf.mxu0
    %1830 = vmatprep.mubr.f32.mxu0 0.0
    %1831 = vmatmul.mubr.f32.gmra.mxu0 %v1759
    %v1832 = vpop.f32.mrf.mxu0
    %v1833 = vadd.f32 0.0, %v1832
    %v1834 = vpop.f32.mrf.mxu0
    %1835 = vdwg.mxu0
    %v1837 = vsel %vm457, %v1753, 0
    %v1840 = vsel %vm457, %v1754, 0
    %1842 = vmatprep.subr.mxu0 0.0
    %1843 = vmatpush1.msra.mxu0 0.0
    %1844 = vmatprep.subr.mxu0 0.0
    %1845 = vmatpush1.msra.mxu0 0.0
    %1846 = vmatprep.subr.mxu0 0.0
    %1847 = vmatpush1.msra.mxu0 0.0
    %1848 = vmatprep.subr.mxu0 0.0
    %1849 = vmatpush1.msra.mxu0 0.0
    %1850 = vmatprep.subr.mxu0 0.0
    %1851 = vmatpush1.msra.mxu0 0.0
    %1852 = vmatprep.subr.mxu0 0.0
    %1853 = vmatpush1.msra.mxu0 0.0
    %1854 = vmatprep.subr.mxu0 0.0
    %1855 = vmatpush1.msra.mxu0 0.0
    %1856 = vmatprep.subr.mxu0 0.0
    %1857 = vmatpush1.msra.mxu0 0.0
    %1858 = vmatprep.subr.mxu0 0.0
    %1859 = vmatpush1.msra.mxu0 0.0
    %1860 = vmatprep.subr.mxu0 0.0
    %1861 = vmatpush1.msra.mxu0 0.0
    %1862 = vmatprep.subr.mxu0 0.0
    %1863 = vmatpush1.msra.mxu0 0.0
    %1864 = vmatprep.subr.mxu0 0.0
    %1865 = vmatpush1.msra.mxu0 0.0
    %1866 = vmatprep.subr.mxu0 0.0
    %1867 = vmatpush1.msra.mxu0 0.0
    %1868 = vmatprep.subr.mxu0 0.0
    %1869 = vmatpush1.msra.mxu0 0.0
    %1870 = vmatprep.subr.mxu0 0.0
    %1871 = vmatpush1.msra.mxu0 %v1441
    %1872 = vmatprep.subr.mxu0 0.0
    %1873 = vmatpush1.msra.mxu0 %v1436
    %1874 = vmatprep.subr.mxu0 0.0
    %1875 = vmatpush2.msra.mxu0 0.0
    %1876 = vmatprep.subr.mxu0 0.0
    %1877 = vmatpush2.msra.mxu0 0.0
    %1878 = vmatprep.subr.mxu0 0.0
    %1879 = vmatpush2.msra.mxu0 0.0
    %1880 = vmatprep.subr.mxu0 0.0
    %1881 = vmatpush2.msra.mxu0 0.0
    %1882 = vmatprep.subr.mxu0 0.0
    %1883 = vmatpush2.msra.mxu0 0.0
    %1884 = vmatprep.subr.mxu0 0.0
    %1885 = vmatpush2.msra.mxu0 0.0
    %1886 = vmatprep.subr.mxu0 0.0
    %1887 = vmatpush2.msra.mxu0 0.0
    %1888 = vmatprep.subr.mxu0 0.0
    %1889 = vmatpush2.msra.mxu0 0.0
    %1890 = vmatprep.subr.mxu0 0.0
    %1891 = vmatpush2.msra.mxu0 0.0
    %1892 = vmatprep.subr.mxu0 0.0
    %1893 = vmatpush2.msra.mxu0 0.0
    %1894 = vmatprep.subr.mxu0 0.0
    %1895 = vmatpush2.msra.mxu0 0.0
    %1896 = vmatprep.subr.mxu0 0.0
    %1897 = vmatpush2.msra.mxu0 0.0
    %1898 = vmatprep.subr.mxu0 0.0
    %1899 = vmatpush2.msra.mxu0 0.0
    %1900 = vmatprep.subr.mxu0 0.0
    %1901 = vmatpush2.msra.mxu0 0.0
    %1902 = vmatprep.subr.mxu0 0.0
    %1903 = vmatpush2.msra.mxu0 0.0
    %1904 = vmatprep.subr.mxu0 0.0
    %1905 = vmatpush2.msra.mxu0 0.0
    %1906 = vmatprep.mubr.f32.mxu0 0.0
    %1907 = vmatmul.mubr.f32.gmra.mxu0 %v1837
    %v1908 = vpop.f32.mrf.mxu0
    %v1909 = vadd.f32 0.0, %v1908
    %v1910 = vpop.f32.mrf.mxu0
    %1911 = vmatprep.mubr.f32.mxu0 0.0
    %1912 = vmatmul.mubr.f32.gmra.mxu0 %v1840
    %v1913 = vpop.f32.mrf.mxu0
    %v1914 = vadd.f32 0.0, %v1913
    %v1915 = vpop.f32.mrf.mxu0
    %1916 = vdwg.mxu0
    %v1917 = vld [vmem:[%s13] sm:$0x1]
    %v1919 = vlaneseq
    %v1920 = vshrl.u32 %v1919, 7
    %v1921 = vsub.s32 0, %v1920
    %v1922 = vrot.slane %v1917, %v1921
    %v1924 = vadd.f32 %v1828, %v1922
    %v1925 = vadd.f32 %v1833, %v1922
    %v1926 = vadd.f32 %v1909, %v1922
    %v1927 = vadd.f32 %v1914, %v1922
    %v1928 = vsel %vm457, %v1924, 0.0
    %v1929 = vsel %vm457, %v1925, 0.0
    %v1930 = vadd.f32 %v1928, %v1929
    %v1931 = vrot.slane %v1930, 4
    %v1932 = vadd.f32 %v1930, %v1931
    %v1933 = vrot.slane %v1932, 2
    %v1934 = vadd.f32 %v1932, %v1933
    %v1935 = vrot.slane %v1934, 1
    %v1936 = vadd.f32 %v1934, %v1935
    %v1937 = vrcp.pop 16.0
    %v1938 = vmul.f32 %v1936, %v1937
    %v1939 = vxor.u32 %v1938, 2147483648
    %v1940 = vmul.f32 %v1939, 1.442695
    %v1941 = vpow.pop %v1940
    %v1942 = vadd.f32 %v1941, 1.0
    %v1943 = vrcp.pop %v1942
    %v1944 = vmul.f32 1.0, %v1943
    %v1945 = vld [vmem:[%s14] sm:$0xff]
    %v1946 = vld [vmem:[%s14 + $0x8] sm:$0xff]
    %v1948 = vsel %vm457, %v1944, 0
    %v1951 = vsel %vm457, %v1945, 0
    %v1954 = vsel %vm457, %v1946, 0
    %1956 = vmatprep.subr.mxu0 0.0
    %1957 = vmatpush1.xpose.msra.mxu0 0.0
    %1958 = vmatprep.subr.mxu0 0.0
    %1959 = vmatpush1.xpose.msra.mxu0 0.0
    %1960 = vmatprep.subr.mxu0 0.0
    %1961 = vmatpush1.xpose.msra.mxu0 0.0
    %1962 = vmatprep.subr.mxu0 0.0
    %1963 = vmatpush1.xpose.msra.mxu0 0.0
    %1964 = vmatprep.subr.mxu0 0.0
    %1965 = vmatpush1.xpose.msra.mxu0 0.0
    %1966 = vmatprep.subr.mxu0 0.0
    %1967 = vmatpush1.xpose.msra.mxu0 0.0
    %1968 = vmatprep.subr.mxu0 0.0
    %1969 = vmatpush1.xpose.msra.mxu0 0.0
    %1970 = vmatprep.subr.mxu0 0.0
    %1971 = vmatpush1.xpose.msra.mxu0 0.0
    %1972 = vmatprep.subr.mxu0 0.0
    %1973 = vmatpush1.xpose.msra.mxu0 0.0
    %1974 = vmatprep.subr.mxu0 0.0
    %1975 = vmatpush1.xpose.msra.mxu0 0.0
    %1976 = vmatprep.subr.mxu0 0.0
    %1977 = vmatpush1.xpose.msra.mxu0 0.0
    %1978 = vmatprep.subr.mxu0 0.0
    %1979 = vmatpush1.xpose.msra.mxu0 0.0
    %1980 = vmatprep.subr.mxu0 0.0
    %1981 = vmatpush1.xpose.msra.mxu0 0.0
    %1982 = vmatprep.subr.mxu0 0.0
    %1983 = vmatpush1.xpose.msra.mxu0 0.0
    %1984 = vmatprep.subr.mxu0 0.0
    %1985 = vmatpush1.xpose.msra.mxu0 %v1954
    %1986 = vmatprep.subr.mxu0 0.0
    %1987 = vmatpush1.xpose.msra.mxu0 %v1951
    %1988 = vmatprep.subr.mxu0 0.0
    %1989 = vmatpush2.xpose.msra.mxu0 0.0
    %1990 = vmatprep.subr.mxu0 0.0
    %1991 = vmatpush2.xpose.msra.mxu0 0.0
    %1992 = vmatprep.subr.mxu0 0.0
    %1993 = vmatpush2.xpose.msra.mxu0 0.0
    %1994 = vmatprep.subr.mxu0 0.0
    %1995 = vmatpush2.xpose.msra.mxu0 0.0
    %1996 = vmatprep.subr.mxu0 0.0
    %1997 = vmatpush2.xpose.msra.mxu0 0.0
    %1998 = vmatprep.subr.mxu0 0.0
    %1999 = vmatpush2.xpose.msra.mxu0 0.0
    %2000 = vmatprep.subr.mxu0 0.0
    %2001 = vmatpush2.xpose.msra.mxu0 0.0
    %2002 = vmatprep.subr.mxu0 0.0
    %2003 = vmatpush2.xpose.msra.mxu0 0.0
    %2004 = vmatprep.subr.mxu0 0.0
    %2005 = vmatpush2.xpose.msra.mxu0 0.0
    %2006 = vmatprep.subr.mxu0 0.0
    %2007 = vmatpush2.xpose.msra.mxu0 0.0
    %2008 = vmatprep.subr.mxu0 0.0
    %2009 = vmatpush2.xpose.msra.mxu0 0.0
    %2010 = vmatprep.subr.mxu0 0.0
    %2011 = vmatpush2.xpose.msra.mxu0 0.0
    %2012 = vmatprep.subr.mxu0 0.0
    %2013 = vmatpush2.xpose.msra.mxu0 0.0
    %2014 = vmatprep.subr.mxu0 0.0
    %2015 = vmatpush2.xpose.msra.mxu0 0.0
    %2016 = vmatprep.subr.mxu0 0.0
    %2017 = vmatpush2.xpose.msra.mxu0 0.0
    %2018 = vmatprep.subr.mxu0 0.0
    %2019 = vmatpush2.xpose.msra.mxu0 0.0
    %2020 = vmatprep.mubr.f32.mxu0 0.0
    %2021 = vmatmul.mubr.f32.gmra.mxu0 %v1948
    %v2022 = vpop.f32.mrf.mxu0
    %v2023 = vadd.f32 0.0, %v2022
    %v2024 = vpop.f32.mrf.mxu0
    %2025 = vdwg.mxu0
    %s2026 = sld [smem:[#allocation2]]
    %v2027 = vstv %s2026
    %v2029 = vsel %vm457, %v2023, 0
    %v2032 = vsel %vm457, %v1924, 0
    %v2035 = vsel %vm457, %v1925, 0
    %v2038 = vsel %vm457, %v1926, 0
    %v2041 = vsel %vm457, %v1927, 0
    %2043 = vmatprep.subr.mxu0 0.0
    %2044 = vmatpush1.xpose.msra.mxu0 0.0
    %2045 = vmatprep.subr.mxu0 0.0
    %2046 = vmatpush1.xpose.msra.mxu0 0.0
    %2047 = vmatprep.subr.mxu0 0.0
    %2048 = vmatpush1.xpose.msra.mxu0 0.0
    %2049 = vmatprep.subr.mxu0 0.0
    %2050 = vmatpush1.xpose.msra.mxu0 0.0
    %2051 = vmatprep.subr.mxu0 0.0
    %2052 = vmatpush1.xpose.msra.mxu0 0.0
    %2053 = vmatprep.subr.mxu0 0.0
    %2054 = vmatpush1.xpose.msra.mxu0 0.0
    %2055 = vmatprep.subr.mxu0 0.0
    %2056 = vmatpush1.xpose.msra.mxu0 0.0
    %2057 = vmatprep.subr.mxu0 0.0
    %2058 = vmatpush1.xpose.msra.mxu0 0.0
    %2059 = vmatprep.subr.mxu0 0.0
    %2060 = vmatpush1.xpose.msra.mxu0 0.0
    %2061 = vmatprep.subr.mxu0 0.0
    %2062 = vmatpush1.xpose.msra.mxu0 0.0
    %2063 = vmatprep.subr.mxu0 0.0
    %2064 = vmatpush1.xpose.msra.mxu0 0.0
    %2065 = vmatprep.subr.mxu0 0.0
    %2066 = vmatpush1.xpose.msra.mxu0 0.0
    %2067 = vmatprep.subr.mxu0 0.0
    %2068 = vmatpush1.xpose.msra.mxu0 %v2041
    %2069 = vmatprep.subr.mxu0 0.0
    %2070 = vmatpush1.xpose.msra.mxu0 %v2038
    %2071 = vmatprep.subr.mxu0 0.0
    %2072 = vmatpush1.xpose.msra.mxu0 %v2035
    %2073 = vmatprep.subr.mxu0 0.0
    %2074 = vmatpush1.xpose.msra.mxu0 %v2032
    %2075 = vmatprep.subr.mxu0 0.0
    %2076 = vmatpush2.xpose.msra.mxu0 0.0
    %2077 = vmatprep.subr.mxu0 0.0
    %2078 = vmatpush2.xpose.msra.mxu0 0.0
    %2079 = vmatprep.subr.mxu0 0.0
    %2080 = vmatpush2.xpose.msra.mxu0 0.0
    %2081 = vmatprep.subr.mxu0 0.0
    %2082 = vmatpush2.xpose.msra.mxu0 0.0
    %2083 = vmatprep.subr.mxu0 0.0
    %2084 = vmatpush2.xpose.msra.mxu0 0.0
    %2085 = vmatprep.subr.mxu0 0.0
    %2086 = vmatpush2.xpose.msra.mxu0 0.0
    %2087 = vmatprep.subr.mxu0 0.0
    %2088 = vmatpush2.xpose.msra.mxu0 0.0
    %2089 = vmatprep.subr.mxu0 0.0
    %2090 = vmatpush2.xpose.msra.mxu0 0.0
    %2091 = vmatprep.subr.mxu0 0.0
    %2092 = vmatpush2.xpose.msra.mxu0 0.0
    %2093 = vmatprep.subr.mxu0 0.0
    %2094 = vmatpush2.xpose.msra.mxu0 0.0
    %2095 = vmatprep.subr.mxu0 0.0
    %2096 = vmatpush2.xpose.msra.mxu0 0.0
    %2097 = vmatprep.subr.mxu0 0.0
    %2098 = vmatpush2.xpose.msra.mxu0 0.0
    %2099 = vmatprep.subr.mxu0 0.0
    %2100 = vmatpush2.xpose.msra.mxu0 0.0
    %2101 = vmatprep.subr.mxu0 0.0
    %2102 = vmatpush2.xpose.msra.mxu0 0.0
    %2103 = vmatprep.subr.mxu0 0.0
    %2104 = vmatpush2.xpose.msra.mxu0 0.0
    %2105 = vmatprep.subr.mxu0 0.0
    %2106 = vmatpush2.xpose.msra.mxu0 0.0
    %2107 = vmatprep.mubr.f32.mxu0 0.0
    %2108 = vmatmul.mubr.f32.gmra.mxu0 %v2029
    %v2109 = vpop.f32.mrf.mxu0
    %v2110 = vadd.f32 %v2027, %v2109
    %v2111 = vpop.f32.mrf.mxu0
    %2112 = vdwg.mxu0
    %vm2113 = vcmask 253952
    %2114 = vst.msk [vmem:[#allocation8] sm:$0x1] %vm2113, %v2110
    // Predicated region
    $region74: #{dgi_forward.1} parent=1 // pred_check
      _
    $region75: #{dgi_forward.1} parent=1 // pred_check_branch
      %2116 = sbr.rel (0) target = $region77
    $region76: #{dgi_forward.1} parent=1 // pred_region
      %s2118 = ssub.s32 16, 16
      %2119 = vsyncadd [#allocation4], %s2118
      %s2121 = sshll.u32 [#allocation8], 4
      %s2122 = int_to_ptr.vmem [resolvable:$true] %s2121
      %2124 = dma.vmem_to_hbm [thread:$0]  %s2122, 16, %s16, [#allocation4]
    $region77: #{dgi_forward.1} parent=1 // pred_fallthru
      _
    // Predicated region
    $region78: #{dgi_forward.1} parent=1 // pred_check
      _
    $region79: #{dgi_forward.1} parent=1 // pred_check_branch
      %2126 = sbr.rel (0) target = $region81
    $region80: #{dgi_forward.1} parent=1 // pred_region
      %2127 = dma.done [#allocation4], 16
    $region81: #{dgi_forward.1} parent=1 // pred_fallthru
      _
    %2128 = vsyncpa [#allocation4], 1
    %2129 = vsyncpa [#allocation5], 1
    %2130 = vsyncpa [#allocation7], 1

</llo_original>
